<compile_context>
chip_gen: v7x
topology: tpu7x:2x2x1
jax: 0.10.0
libtpu: 0.0.40
codegen_flags: <defaults>
</compile_context>

<pallas_src>
import jax
import jax.numpy as jnp
from jax.experimental import pallas as pl
from jax.experimental.pallas import tpu as pltpu

BN_EPS = 1e-5
_SUBLANE = 8
_LANE = 128                    # pad Kd / C_out to lane width
_TM = 256                      # pass-1 patch rows per grid step
_TM2_MAX = 1024                # pass-2 (memory-bound) row-block cap
_MATMUL_DTYPE = jnp.bfloat16   # MXU-native inputs; f32 accumulation via preferred_element_type
_SMALL_GEMM_MACS = 1 << 13     # below this, XLA fusion beats Pallas padding + per-step overhead


def _round_up(x, m):
    return (x + m - 1) // m * m


def _vmem_limit(bytes_needed):
    # Explicit scoped-VMEM budget: 2x double-buffering slack + headroom, clamped to a value
    # that is valid on every generation (v7x scoped default is 32 MiB).
    return int(min(max(2 * bytes_needed + (4 << 20), 16 << 20), 32 << 20))


def _pick_pass2_tile(m_pad, tm):
    n_tiles = m_pad // tm
    for g in range(n_tiles, 0, -1):
        if n_tiles % g == 0 and tm * g <= _TM2_MAX:
            return tm * g
    return tm


# ---------------------------------------------------------------------------
# Pallas kernels
# ---------------------------------------------------------------------------
def _conv_stats_kernel(p_ref, w_ref, conv_ref, sum_ref, sq_ref):
    """Pass 1: conv tile = P_tile @ W on the MXU (f32 accumulation); store the conv tile in
    bf16 and accumulate f32 per-channel sum / sum-of-squares into the resident outputs."""
    i = pl.program_id(0)

    @pl.when(i == 0)
    def _():
        sum_ref[...] = jnp.zeros_like(sum_ref)
        sq_ref[...] = jnp.zeros_like(sq_ref)

    conv = jnp.dot(p_ref[...], w_ref[...], preferred_element_type=jnp.float32)
    conv_ref[...] = conv.astype(conv_ref.dtype)
    sum_ref[...] += jnp.sum(conv, axis=0, keepdims=True)
    sq_ref[...] += jnp.sum(conv * conv, axis=0, keepdims=True)


def _bn_relu_kernel(conv_ref, scale_ref, shift_ref, o_ref):
    """Pass 2: y = relu(conv * scale + shift). bf16 in/out, output aliased onto the input."""
    x = conv_ref[...].astype(jnp.float32)
    o_ref[...] = jnp.maximum(x * scale_ref[...] + shift_ref[...], 0.0).astype(o_ref.dtype)


def _conv_bias_kernel(p_ref, w_ref, b_ref, o_ref):
    """use_bn_act=False path (only used when the GEMM is large enough for Pallas)."""
    acc = jnp.dot(p_ref[...], w_ref[...], preferred_element_type=jnp.float32)
    o_ref[...] = (acc + b_ref[...]).astype(o_ref.dtype)


# ---------------------------------------------------------------------------
# Glue shared by the Pallas path and the reference path (all NHWC)
# ---------------------------------------------------------------------------
def _batchnorm_train(x, gamma, beta):
    x = x.astype(jnp.float32)
    mean = jnp.mean(x, axis=(0, 1, 2), keepdims=True)
    var = jnp.mean((x - mean) ** 2, axis=(0, 1, 2), keepdims=True)
    return (x - mean) * jax.lax.rsqrt(var + BN_EPS) * gamma + beta


def _conv_block_xla(x, weight, bias, gamma, beta, *, stride, padding, use_bn_act):
    """Plain-XLA conv_block (NHWC). Small-GEMM fallback AND the full-f32 reference."""
    x = x.astype(jnp.float32)
    out = jax.lax.conv_general_dilated(
        x, weight, (stride, stride),
        ((padding, padding), (padding, padding)),
        dimension_numbers=("NHWC", "OIHW", "NHWC"),
    ) + bias
    if use_bn_act:
        out = _batchnorm_train(out, gamma, beta)
        out = jnp.maximum(out, 0.0)
    return out


def _im2col_nhwc(x, kh, kw, stride, padding):
    n, h, w, c_in = x.shape
    h_out = (h + 2 * padding - kh) // stride + 1
    w_out = (w + 2 * padding - kw) // stride + 1
    if kh == 1 and kw == 1 and padding == 0 and stride == 1:
        return x.reshape(n * h * w, c_in), h_out, w_out
    # TODO(synk): implicit GEMM instead of materializing the kh*kw-inflated patch matrix.
    x_pad = jnp.pad(x, ((0, 0), (padding, padding), (padding, padding), (0, 0)))
    cols = [x_pad[:, ky:ky + stride * h_out:stride, kx:kx + stride * w_out:stride, :]
            for ky in range(kh) for kx in range(kw)]
    patches = jnp.concatenate(cols, axis=-1)      # (N, H_out, W_out, kh*kw*C_in), tap-major
    return patches.reshape(n * h_out * w_out, kh * kw * c_in), h_out, w_out


# ---------------------------------------------------------------------------
# conv_block (Conv2d [+ train-mode BN + ReLU]) via the Pallas kernels (NHWC in / NHWC out)
# ---------------------------------------------------------------------------
def conv_block_forward(x, weight, bias, gamma, beta, *, stride, padding, use_bn_act):
    n, h, w, c_in = x.shape
    c_out, _, kh, kw = weight.shape
    h_out = (h + 2 * padding - kh) // stride + 1
    w_out = (w + 2 * padding - kw) // stride + 1
    m = n * h_out * w_out
    kd = c_in * kh * kw

    # Tiny GEMMs (CAM 1x1 convs on pooled 1x1 maps, SSAM column convs): the 128-lane padding
    # and ~0.35us/step Pallas overhead dominate, so let XLA fuse them instead.
    if m * kd * c_out < _SMALL_GEMM_MACS or m < 2 * _SUBLANE:
        return _conv_block_xla(x, weight, bias, gamma, beta,
                               stride=stride, padding=padding, use_bn_act=use_bn_act)

    p, _, _ = _im2col_nhwc(x.astype(_MATMUL_DTYPE), kh, kw, stride, padding)

    kd_pad = _round_up(kd, _LANE)
    c_pad = _round_up(c_out, _LANE)
    tm = _TM if m >= _TM else _round_up(m, _SUBLANE)
    m_pad = _round_up(m, tm)
    n_tiles = m_pad // tm

    # Zero-padded GEMM operands (padded rows/cols contribute exactly 0 to conv and stats).
    p_pad = jnp.pad(p, ((0, m_pad - m), (0, kd_pad - kd)))
    w_mat = weight.astype(_MATMUL_DTYPE).transpose(2, 3, 1, 0).reshape(kd, c_out)
    w_pad = jnp.pad(w_mat, ((0, kd_pad - kd), (0, c_pad - c_out)))

    cost = pl.CostEstimate(
        flops=2 * m_pad * kd_pad * c_pad,
        transcendentals=0,
        bytes_accessed=(m_pad * kd_pad + kd_pad * c_pad + m_pad * c_pad) * 2,
    )
    vmem_p1 = _vmem_limit(2 * tm * kd_pad * 2 + 2 * kd_pad * c_pad * 2
                          + 2 * tm * c_pad * 2 + 4 * c_pad * 4)

    if use_bn_act:
        # ---- pass 1: conv (bf16 out) + global per-channel f32 statistics ----------------
        conv_out, s_out, sq_out = pl.pallas_call(
            _conv_stats_kernel,
            out_shape=(
                jax.ShapeDtypeStruct((m_pad, c_pad), _MATMUL_DTYPE),
                jax.ShapeDtypeStruct((1, c_pad), jnp.float32),
                jax.ShapeDtypeStruct((1, c_pad), jnp.float32),
            ),
            grid_spec=pltpu.PrefetchScalarGridSpec(
                num_scalar_prefetch=0,
                grid=(n_tiles,),
                in_specs=[
                    pl.BlockSpec((tm, kd_pad), lambda i: (i, 0)),
                    pl.BlockSpec((kd_pad, c_pad), lambda i: (0, 0)),
                ],
                out_specs=[
                    pl.BlockSpec((tm, c_pad), lambda i: (i, 0)),
                    pl.BlockSpec((1, c_pad), lambda i: (0, 0)),
                    pl.BlockSpec((1, c_pad), lambda i: (0, 0)),
                ],
            ),
            compiler_params=pltpu.CompilerParams(
                dimension_semantics=("arbitrary",), vmem_limit_bytes=vmem_p1),
            cost_estimate=cost,
        )(p_pad, w_pad)

        # ---- fold train-mode BN into per-channel scale/shift (tiny glue, f32) -----------
        # The conv bias is omitted above: it is exactly cancelled by the batch-mean
        # subtraction of train-mode BN (NOT valid for inference-mode/running stats).
        mean = s_out / m
        # TODO(synk): E[x^2]-E[x]^2 cancels catastrophically if |mean| >> std; use a
        # shifted / Welford-style merge for production-scale statistics.
        var = jnp.maximum(sq_out / m - mean * mean, 0.0)
        inv_std = jax.lax.rsqrt(var + BN_EPS)
        gamma_pad = jnp.pad(gamma.astype(jnp.float32).reshape(1, c_out),
                            ((0, 0), (0, c_pad - c_out)))
        beta_pad = jnp.pad(beta.astype(jnp.float32).reshape(1, c_out),
                           ((0, 0), (0, c_pad - c_out)))
        scale = gamma_pad * inv_std
        shift = beta_pad - mean * scale

        # ---- pass 2: normalize + ReLU (HBM-bound; big tiles, bf16, output aliased) -------
        tm2 = _pick_pass2_tile(m_pad, tm)
        vmem_p2 = _vmem_limit(4 * tm2 * c_pad * 2 + 4 * c_pad * 4)
        out_full = pl.pallas_call(
            _bn_relu_kernel,
            out_shape=jax.ShapeDtypeStruct((m_pad, c_pad), _MATMUL_DTYPE),
            grid_spec=pltpu.PrefetchScalarGridSpec(
                num_scalar_prefetch=0,
                grid=(m_pad // tm2,),
                in_specs=[
                    pl.BlockSpec((tm2, c_pad), lambda i: (i, 0)),
                    pl.BlockSpec((1, c_pad), lambda i: (0, 0)),
                    pl.BlockSpec((1, c_pad), lambda i: (0, 0)),
                ],
                out_specs=pl.BlockSpec((tm2, c_pad), lambda i: (i, 0)),
            ),
            compiler_params=pltpu.CompilerParams(
                dimension_semantics=("parallel",), vmem_limit_bytes=vmem_p2),
            input_output_aliases={0: 0},
        )(conv_out, scale, shift)
    else:
        b_pad = jnp.pad(bias.astype(jnp.float32).reshape(1, c_out),
                        ((0, 0), (0, c_pad - c_out)))
        out_full = pl.pallas_call(
            _conv_bias_kernel,
            out_shape=jax.ShapeDtypeStruct((m_pad, c_pad), _MATMUL_DTYPE),
            grid_spec=pltpu.PrefetchScalarGridSpec(
                num_scalar_prefetch=0,
                grid=(n_tiles,),
                in_specs=[
                    pl.BlockSpec((tm, kd_pad), lambda i: (i, 0)),
                    pl.BlockSpec((kd_pad, c_pad), lambda i: (0, 0)),
                    pl.BlockSpec((1, c_pad), lambda i: (0, 0)),
                ],
                out_specs=pl.BlockSpec((tm, c_pad), lambda i: (i, 0)),
            ),
            compiler_params=pltpu.CompilerParams(
                dimension_semantics=("parallel",), vmem_limit_bytes=vmem_p1),
            cost_estimate=cost,
        )(p_pad, w_pad, b_pad)

    # NHWC output, kept in bf16 (next layer's GEMM casts to bf16 anyway).
    return out_full[:m, :c_out].reshape(n, h_out, w_out, c_out)


# ---------------------------------------------------------------------------
# APF composition glue (NHWC)
# ---------------------------------------------------------------------------
def _bilinear_resize(x, out_h, out_w):
    """PyTorch F.interpolate(mode='bilinear', align_corners=False) semantics, NHWC."""
    x = x.astype(jnp.float32)
    n, in_h, in_w, c = x.shape

    def coords(out_size, in_size):
        src = (jnp.arange(out_size, dtype=jnp.float32) + 0.5) * (in_size / out_size) - 0.5
        src = jnp.clip(src, 0.0, in_size - 1)
        i0 = jnp.floor(src).astype(jnp.int32)
        i1 = jnp.minimum(i0 + 1, in_size - 1)
        return i0, i1, src - i0.astype(jnp.float32)

    y0, y1, fy = coords(out_h, in_h)
    x0, x1, fx = coords(out_w, in_w)
    top = x[:, y0, :, :]
    bot = x[:, y1, :, :]
    rows = top * (1.0 - fy)[None, :, None, None] + bot * fy[None, :, None, None]
    left = rows[:, :, x0, :]
    right = rows[:, :, x1, :]
    return left * (1.0 - fx)[None, None, :, None] + right * fx[None, None, :, None]


def _cam(x, p, conv_fn):
    res = x
    y = jnp.mean(x.astype(jnp.float32), axis=(1, 2), keepdims=True)   # AdaptiveAvgPool2d(1)
    y = conv_fn(y, p['cam1']['w'], p['cam1']['b'], None, None,
                stride=1, padding=0, use_bn_act=False)
    y = jnp.maximum(y, 0.0)
    y = conv_fn(y, p['cam2']['w'], p['cam2']['b'], None, None,
                stride=1, padding=0, use_bn_act=False)
    y = jax.nn.sigmoid(y)
    return res * y


def _ssam(x, p, conv_fn):
    xf = x.astype(jnp.float32)
    max_pool = jnp.max(xf, axis=2, keepdims=True)      # max_pool2d(x, [1, W]) -> (N,H,1,C)
    avg_pool = jnp.mean(xf, axis=2, keepdims=True)     # avg_pool2d(x, [1, W])
    mp = conv_fn(max_pool, p['ssam_conv']['w'], p['ssam_conv']['b'], None, None,
                 stride=1, padding=0, use_bn_act=False)
    ap = conv_fn(avg_pool, p['ssam_conv']['w'], p['ssam_conv']['b'], None, None,
                 stride=1, padding=0, use_bn_act=False)
    mp = _batchnorm_train(mp, p['ssam_bn_max']['g'], p['ssam_bn_max']['be'])
    ap = _batchnorm_train(ap, p['ssam_bn_avg']['g'], p['ssam_bn_avg']['be'])
    att = jax.nn.softmax(mp * ap, axis=-1)             # channel axis in NHWC
    f_scale = att * mp + att * ap
    g = p['ssam_gamma']
    return jnp.maximum(g * f_scale + (1.0 - g) * xf, 0.0)


def _apf(params, x_high, x_low, conv_fn):
    p = params

    def cb(x, name, *, stride, padding):
        q = p[name]
        return conv_fn(x, q['w'], q['b'], q['g'], q['be'],
                       stride=stride, padding=padding, use_bn_act=True)

    x_low = cb(x_low, 'lat', stride=1, padding=0)
    x_high_u = _bilinear_resize(x_high, x_low.shape[1], x_low.shape[2])
    f_c = jnp.concatenate([x_low.astype(jnp.float32), x_high_u], axis=-1)
    f_r = cb(f_c, 'frb0', stride=1, padding=0)
    f_r = cb(f_r, 'frb1', stride=1, padding=1)
    f_a = cb(x_low, 'fc', stride=1, padding=1) * _cam(f_r, p, conv_fn)
    f_b = cb(x_high_u, 'fs', stride=1, padding=1) * _ssam(f_r, p, conv_fn)
    f_out = f_a + f_b
    apf_out = cb(f_out, 'apf', stride=1, padding=1)
    cls_out = cb(f_out, 'cls', stride=1, padding=1)
    return apf_out, cls_out


@jax.jit
def apf_forward(params, x_high, x_low):
    xh = jnp.transpose(x_high, (0, 2, 3, 1))           # single NCHW->NHWC at the boundary
    xl = jnp.transpose(x_low, (0, 2, 3, 1))
    a, c = _apf(params, xh, xl, conv_block_forward)
    return (jnp.transpose(a, (0, 3, 1, 2)).astype(jnp.float32),
            jnp.transpose(c, (0, 3, 1, 2)).astype(jnp.float32))


@jax.jit
def apf_reference(params, x_high, x_low):
    xh = jnp.transpose(x_high, (0, 2, 3, 1))
    xl = jnp.transpose(x_low, (0, 2, 3, 1))
    a, c = _apf(params, xh, xl, _conv_block_xla)
    return (jnp.transpose(a, (0, 3, 1, 2)).astype(jnp.float32),
            jnp.transpose(c, (0, 3, 1, 2)).astype(jnp.float32))


# ---------------------------------------------------------------------------
# Test
# ---------------------------------------------------------------------------
def _conv_params(key, c_out, c_in, k, with_bn):
    kw_, kb, kg, kbe = jax.random.split(key, 4)
    prm = {
        'w': 0.1 * jax.random.normal(kw_, (c_out, c_in, k, k), jnp.float32),
        'b': 0.1 * jax.random.normal(kb, (c_out,), jnp.float32),
    }
    if with_bn:
        prm['g'] = 1.0 + 0.1 * jax.random.normal(kg, (c_out,), jnp.float32)
        prm['be'] = 0.1 * jax.random.normal(kbe, (c_out,), jnp.float32)
    return prm


if __name__ == "__main__":
    CH_HIGH, CH_LOW, CH_OUT, CLASSES = 4, 8, 8, 1
    N = 2
    H_LOW = W_LOW = 16
    H_HIGH = W_HIGH = 8

    key = jax.random.PRNGKey(0)
    keys = jax.random.split(key, 16)
    params = {
        'lat':  _conv_params(keys[0], CH_HIGH, CH_LOW, 1, True),
        'frb0': _conv_params(keys[1], CH_OUT, CH_HIGH * 2, 1, True),
        'frb1': _conv_params(keys[2], CH_OUT, CH_OUT, 3, True),
        'fc':   _conv_params(keys[3], CH_OUT, CH_HIGH, 3, True),
        'fs':   _conv_params(keys[4], CH_OUT, CH_HIGH, 3, True),
        'cam1': _conv_params(keys[5], CH_OUT, CH_OUT, 1, False),
        'cam2': _conv_params(keys[6], CH_OUT, CH_OUT, 1, False),
        'ssam_conv': _conv_params(keys[7], CH_OUT, CH_OUT, 1, False),
        'ssam_bn_max': {'g': 1.0 + 0.1 * jax.random.normal(keys[8], (CH_OUT,), jnp.float32),
                        'be': 0.1 * jax.random.normal(keys[9], (CH_OUT,), jnp.float32)},
        'ssam_bn_avg': {'g': 1.0 + 0.1 * jax.random.normal(keys[10], (CH_OUT,), jnp.float32),
                        'be': 0.1 * jax.random.normal(keys[11], (CH_OUT,), jnp.float32)},
        # nn.Parameter initialized to 0 in the module; use a nonzero "learned" value so the
        # SSAM mixing path is actually exercised.
        'ssam_gamma': jnp.asarray(0.3, dtype=jnp.float32),
        'cls':  _conv_params(keys[12], CLASSES, CH_OUT, 3, True),
        'apf':  _conv_params(keys[13], CH_OUT, CH_OUT, 3, True),
    }
    x_high = jax.random.normal(keys[14], (N, CH_HIGH, H_HIGH, W_HIGH), jnp.float32)
    x_low = jax.random.normal(keys[15], (N, CH_LOW, H_LOW, W_LOW), jnp.float32)

    apf_out, cls_out = jax.block_until_ready(apf_forward(params, x_high, x_low))
    assert apf_out.shape == (N, CH_OUT, H_LOW, W_LOW), apf_out.shape
    assert cls_out.shape == (N, CLASSES, H_LOW, W_LOW), cls_out.shape

    apf_ref, cls_ref = apf_reference(params, x_high, x_low)
    # bf16 MXU inputs + bf16 stored activations across the 8-conv-deep, BN-renormalized
    # composition accumulate a few percent worst-case error vs the full-f32 reference.
    assert jnp.allclose(apf_out, apf_ref, rtol=1e-1, atol=1e-1), \
        float(jnp.abs(apf_out - apf_ref).max())
    assert jnp.allclose(cls_out, cls_ref, rtol=1e-1, atol=1e-1), \
        float(jnp.abs(cls_out - cls_ref).max())

    print("KERNEL_OK")
</pallas_src>

<mosaic_0001>
module attributes {stable_mosaic.version = 11 : i64} {
  func.func @_conv_stats_kernel(%arg0: i32, %arg1: memref<256x128xbf16, #tpu.memory_space<vmem>>, %arg2: memref<128x128xbf16, #tpu.memory_space<vmem>>, %arg3: memref<256x128xbf16, #tpu.memory_space<vmem>>, %arg4: memref<1x128xf32, #tpu.memory_space<vmem>>, %arg5: memref<1x128xf32, #tpu.memory_space<vmem>>) attributes {dimension_semantics = [#tpu.dimension_semantics<arbitrary>], iteration_bounds = array<i64: 2>, scalar_prefetch = 0 : i64, scratch_operands = 0 : i64, tpu.core_type = #tpu.core_type<tc>, window_params = [{transform_indices = @transform_0, window_bounds = array<i64: 256, 128>}, {pipeline_mode = #tpu.pipeline_mode<synchronous>, transform_indices = @transform_1, window_bounds = array<i64: 128, 128>}, {transform_indices = @transform_2, window_bounds = array<i64: 256, 128>}, {pipeline_mode = #tpu.pipeline_mode<synchronous>, transform_indices = @transform_3, window_bounds = array<i64: 1, 128>}, {pipeline_mode = #tpu.pipeline_mode<synchronous>, transform_indices = @transform_4, window_bounds = array<i64: 1, 128>}]} {
    %c0_i32 = arith.constant 0 : i32
    %0 = arith.cmpi eq, %arg0, %c0_i32 : i32
    %1 = arith.extui %0 : i1 to i32
    %c0_i32_0 = arith.constant 0 : i32
    %2 = arith.cmpi ne, %1, %c0_i32_0 : i32
    scf.if %2 {
      %cst_16 = arith.constant 0.000000e+00 : f32
      %19 = vector.broadcast %cst_16 : f32 to vector<1x128xf32>
      %c0_17 = arith.constant 0 : index
      %c0_18 = arith.constant 0 : index
      %20 = vector.load %arg4[%c0_17, %c0_18] : memref<1x128xf32, #tpu.memory_space<vmem>>, vector<1x128xf32>
      tpu.vector_store %arg4[%c0_17, %c0_18], %19 {strides = array<i32>} : memref<1x128xf32, #tpu.memory_space<vmem>>, vector<1x128xf32>,
      %cst_19 = arith.constant 0.000000e+00 : f32
      %21 = vector.broadcast %cst_19 : f32 to vector<1x128xf32>
      %c0_20 = arith.constant 0 : index
      %c0_21 = arith.constant 0 : index
      %22 = vector.load %arg5[%c0_20, %c0_21] : memref<1x128xf32, #tpu.memory_space<vmem>>, vector<1x128xf32>
      tpu.vector_store %arg5[%c0_20, %c0_21], %21 {strides = array<i32>} : memref<1x128xf32, #tpu.memory_space<vmem>>, vector<1x128xf32>,
    } else {
    }
    %c0 = arith.constant 0 : index
    %c0_1 = arith.constant 0 : index
    %3 = vector.load %arg1[%c0, %c0_1] : memref<256x128xbf16, #tpu.memory_space<vmem>>, vector<256x128xbf16>
    %c0_2 = arith.constant 0 : index
    %c0_3 = arith.constant 0 : index
    %4 = vector.load %arg2[%c0_2, %c0_3] : memref<128x128xbf16, #tpu.memory_space<vmem>>, vector<128x128xbf16>
    %cst = arith.constant dense<0.000000e+00> : vector<256x128xf32>
    %5 = tpu.matmul %3, %4, %cst {dimension_numbers = #tpu.dot_dimension_numbers<[1], [0], [0], [1], [0, 0, 1, 1], [], []>} : vector<256x128xbf16>, vector<128x128xbf16>, vector<256x128xf32> -> vector<256x128xf32>
    %6 = arith.truncf %5 : vector<256x128xf32> to vector<256x128xbf16>
    %c0_4 = arith.constant 0 : index
    %c0_5 = arith.constant 0 : index
    %7 = vector.load %arg3[%c0_4, %c0_5] : memref<256x128xbf16, #tpu.memory_space<vmem>>, vector<256x128xbf16>
    tpu.vector_store %arg3[%c0_4, %c0_5], %6 {strides = array<i32>} : memref<256x128xbf16, #tpu.memory_space<vmem>>, vector<256x128xbf16>,
    %c0_6 = arith.constant 0 : index
    %c0_7 = arith.constant 0 : index
    %8 = vector.load %arg4[%c0_6, %c0_7] : memref<1x128xf32, #tpu.memory_space<vmem>>, vector<1x128xf32>
    %cst_8 = arith.constant dense<0.000000e+00> : vector<128xf32>
    %9 = vector.multi_reduction <add>, %5, %cst_8 [0] : vector<256x128xf32> to vector<128xf32>
    %10 = vector.shape_cast %9 : vector<128xf32> to vector<1x128xf32>
    %11 = arith.addf %8, %10 : vector<1x128xf32>
    %c0_9 = arith.constant 0 : index
    %c0_10 = arith.constant 0 : index
    %12 = vector.load %arg4[%c0_9, %c0_10] : memref<1x128xf32, #tpu.memory_space<vmem>>, vector<1x128xf32>
    tpu.vector_store %arg4[%c0_9, %c0_10], %11 {strides = array<i32>} : memref<1x128xf32, #tpu.memory_space<vmem>>, vector<1x128xf32>,
    %c0_11 = arith.constant 0 : index
    %c0_12 = arith.constant 0 : index
    %13 = vector.load %arg5[%c0_11, %c0_12] : memref<1x128xf32, #tpu.memory_space<vmem>>, vector<1x128xf32>
    %14 = arith.mulf %5, %5 : vector<256x128xf32>
    %cst_13 = arith.constant dense<0.000000e+00> : vector<128xf32>
    %15 = vector.multi_reduction <add>, %14, %cst_13 [0] : vector<256x128xf32> to vector<128xf32>
    %16 = vector.shape_cast %15 : vector<128xf32> to vector<1x128xf32>
    %17 = arith.addf %13, %16 : vector<1x128xf32>
    %c0_14 = arith.constant 0 : index
    %c0_15 = arith.constant 0 : index
    %18 = vector.load %arg5[%c0_14, %c0_15] : memref<1x128xf32, #tpu.memory_space<vmem>>, vector<1x128xf32>
    tpu.vector_store %arg5[%c0_14, %c0_15], %17 {strides = array<i32>} : memref<1x128xf32, #tpu.memory_space<vmem>>, vector<1x128xf32>,
    return
  }
  func.func @transform_0(%arg0: i32) -> (i32, i32) {
    %c0_i32 = arith.constant 0 : i32
    %c0_i32_0 = arith.constant 0 : i32
    return %arg0, %c0_i32 : i32, i32
  }
  func.func @transform_1(%arg0: i32) -> (i32, i32) {
    %c0_i32 = arith.constant 0 : i32
    %c0_i32_0 = arith.constant 0 : i32
    %c0_i32_1 = arith.constant 0 : i32
    return %c0_i32, %c0_i32_0 : i32, i32
  }
  func.func @transform_2(%arg0: i32) -> (i32, i32) {
    %c0_i32 = arith.constant 0 : i32
    %c0_i32_0 = arith.constant 0 : i32
    return %arg0, %c0_i32 : i32, i32
  }
  func.func @transform_3(%arg0: i32) -> (i32, i32) {
    %c0_i32 = arith.constant 0 : i32
    %c0_i32_0 = arith.constant 0 : i32
    %c0_i32_1 = arith.constant 0 : i32
    return %c0_i32, %c0_i32_0 : i32, i32
  }
  func.func @transform_4(%arg0: i32) -> (i32, i32) {
    %c0_i32 = arith.constant 0 : i32
    %c0_i32_0 = arith.constant 0 : i32
    %c0_i32_1 = arith.constant 0 : i32
    return %c0_i32, %c0_i32_0 : i32, i32
  }
}

module attributes {stable_mosaic.version = 11 : i64} {
  func.func @_bn_relu_kernel(%arg0: i32, %arg1: memref<512x128xbf16, #tpu.memory_space<vmem>>, %arg2: memref<1x128xf32, #tpu.memory_space<vmem>>, %arg3: memref<1x128xf32, #tpu.memory_space<vmem>>, %arg4: memref<512x128xbf16, #tpu.memory_space<vmem>>) attributes {dimension_semantics = [#tpu.dimension_semantics<parallel>], iteration_bounds = array<i64: 1>, scalar_prefetch = 0 : i64, scratch_operands = 0 : i64, tpu.core_type = #tpu.core_type<tc>, window_params = [{transform_indices = @transform_0, window_bounds = array<i64: 512, 128>}, {pipeline_mode = #tpu.pipeline_mode<synchronous>, transform_indices = @transform_1, window_bounds = array<i64: 1, 128>}, {pipeline_mode = #tpu.pipeline_mode<synchronous>, transform_indices = @transform_2, window_bounds = array<i64: 1, 128>}, {transform_indices = @transform_3, window_bounds = array<i64: 512, 128>}]} {
    %c0 = arith.constant 0 : index
    %c0_0 = arith.constant 0 : index
    %0 = vector.load %arg1[%c0, %c0_0] : memref<512x128xbf16, #tpu.memory_space<vmem>>, vector<512x128xbf16>
    %1 = arith.extf %0 : vector<512x128xbf16> to vector<512x128xf32>
    %c0_1 = arith.constant 0 : index
    %c0_2 = arith.constant 0 : index
    %2 = vector.load %arg2[%c0_1, %c0_2] : memref<1x128xf32, #tpu.memory_space<vmem>>, vector<1x128xf32>
    %3 = vector.broadcast %2 : vector<1x128xf32> to vector<512x128xf32>
    %4 = arith.mulf %1, %3 : vector<512x128xf32>
    %c0_3 = arith.constant 0 : index
    %c0_4 = arith.constant 0 : index
    %5 = vector.load %arg3[%c0_3, %c0_4] : memref<1x128xf32, #tpu.memory_space<vmem>>, vector<1x128xf32>
    %6 = vector.broadcast %5 : vector<1x128xf32> to vector<512x128xf32>
    %7 = arith.addf %4, %6 : vector<512x128xf32>
    %cst = arith.constant 0.000000e+00 : f32
    %8 = vector.broadcast %cst : f32 to vector<512x128xf32>
    %9 = arith.maximumf %7, %8 : vector<512x128xf32>
    %10 = arith.truncf %9 : vector<512x128xf32> to vector<512x128xbf16>
    %c0_5 = arith.constant 0 : index
    %c0_6 = arith.constant 0 : index
    %11 = vector.load %arg4[%c0_5, %c0_6] : memref<512x128xbf16, #tpu.memory_space<vmem>>, vector<512x128xbf16>
    tpu.vector_store %arg4[%c0_5, %c0_6], %10 {strides = array<i32>} : memref<512x128xbf16, #tpu.memory_space<vmem>>, vector<512x128xbf16>,
    return
  }
  func.func @transform_0(%arg0: i32) -> (i32, i32) {
    %c0_i32 = arith.constant 0 : i32
    %c0_i32_0 = arith.constant 0 : i32
    return %arg0, %c0_i32 : i32, i32
  }
  func.func @transform_1(%arg0: i32) -> (i32, i32) {
    %c0_i32 = arith.constant 0 : i32
    %c0_i32_0 = arith.constant 0 : i32
    %c0_i32_1 = arith.constant 0 : i32
    return %c0_i32, %c0_i32_0 : i32, i32
  }
  func.func @transform_2(%arg0: i32) -> (i32, i32) {
    %c0_i32 = arith.constant 0 : i32
    %c0_i32_0 = arith.constant 0 : i32
    %c0_i32_1 = arith.constant 0 : i32
    return %c0_i32, %c0_i32_0 : i32, i32
  }
  func.func @transform_3(%arg0: i32) -> (i32, i32) {
    %c0_i32 = arith.constant 0 : i32
    %c0_i32_0 = arith.constant 0 : i32
    return %arg0, %c0_i32 : i32, i32
  }
}

</mosaic_0001>

<llo_original>
// kernel: apf_forward.14
$region0: #{apf_forward.14}
  #allocation0 [shape = 'u32[]', space=smem, size = 0x4, offset = 0x4, fixed_abs, tag = 'smem constant byte address 0x4 - core index']
  #allocation1 [shape = 'u32[144,128]{1,0:T(1,128)}', space=vmem, size = 0x12000, scoped, tag = 'internal scratch']
  %s0 = inlined_call_operand.vmem [shape: bf16[512,128], index: 0, kind: input, shape index: {}]
  %s1 = inlined_call_operand.vmem [shape: bf16[128,128], index: 1, kind: input, shape index: {}]
  %s2 = inlined_call_operand.vmem [shape: bf16[512,128], index: 2, kind: output, shape index: {0}]
  %s3 = inlined_call_operand.vmem [shape: f32[1,128], index: 3, kind: output, shape index: {1}]
  %s4 = inlined_call_operand.vmem [shape: f32[1,128], index: 4, kind: output, shape index: {2}]
  %5 = xla_tuple %s2, %s3, %s4
  %s6 = sld [smem:[#allocation0]]
  $region61: #{apf_forward.14} parent=0
    _
  %s8 = ssub.s32 1, %s6
  %s9 = scalar_select 0, %s8, %s6
  loop: start=0, step=1, limit=4
  $region2: #{apf_forward.14} parent=0 // loop_pre_header
    _
  $region3: #{apf_forward.14} parent=0 // loop_header
    %s11 = sphi 0, %s15
    %p12 = scmp.ge.s32.totalorder %s11, 4
    %s21 = sphi 0, %s23
    %s24 = sphi 0, %s21
    %s25 = sphi 0, %s24
    %s41 = sphi 0, %s25
    %s45 = sphi 0, %s45
    %s47 = sphi 0, %s45
    %s48 = sphi 0, %s47
    %s62 = sphi 0, %s48
    %s68 = sphi 0, %s70
    %s71 = sphi 0, %s68
    %s72 = sphi 0, %s71
    %s88 = sphi 0, %s72
    %s92 = sphi 0, %s92
    %s94 = sphi 0, %s92
    %s95 = sphi 0, %s94
    %s109 = sphi 0, %s95
    %s113 = sphi 0, %s113
    %s115 = sphi 0, %s113
    %s116 = sphi 0, %s115
    %s130 = sphi 0, %s116
  $region4: #{apf_forward.14} parent=0 // loop_header_branch
    %14 = sbr.rel (%p12) target = $region8
  $region5: #{apf_forward.14} parent=0 // loop_body
    %s16 = ssub.s32 %s11, 1
    %s17 = ssub.s32 %s11, 2
    %s18 = sadd.s32 %s11, 1
    %s19 = ssub.s32 %s11, %s18
    %p20 = scmp.eq.s32.totalorder %s19, 0
    %s22 = sadd.s32 %s21, 1
    %s23 = scalar_select %p20, %s21, %s22
    %p26 = pneg %p20
    %p27 = scmp.eq.s32.totalorder %s11, 1
    %p28 = por %p26, %p27
    %p29 = scmp.ne.s32.totalorder %s21, %s24
    %p30 = scmp.eq.s32.totalorder %s11, 0
    %p31 = por %p29, %p30
    %p32 = scmp.ne.s32.totalorder %s21, %s24
    %p33 = scmp.eq.s32.totalorder %s16, 1
    %p34 = por %p32, %p33
    %p35 = scmp.ne.s32.totalorder %s24, %s25
    %p36 = scmp.eq.s32.totalorder %s16, 0
    %p37 = por %p35, %p36
    %p38 = scmp.ne.s32.totalorder %s24, %s25
    %p39 = scmp.eq.s32.totalorder %s17, 1
    %p40 = por %p38, %p39
    %p42 = scmp.ne.s32.totalorder %s25, %s41
    %p43 = scmp.eq.s32.totalorder %s17, 0
    %p44 = por %p42, %p43
    %s46 = sadd.s32 %s45, 1
    %p49 = scmp.eq.s32.totalorder %s11, 1
    %p50 = scmp.ne.s32.totalorder %s45, %s47
    %p51 = scmp.eq.s32.totalorder %s11, 0
    %p52 = por %p50, %p51
    %p53 = scmp.ne.s32.totalorder %s45, %s47
    %p54 = scmp.eq.s32.totalorder %s16, 1
    %p55 = por %p53, %p54
    %p56 = scmp.ne.s32.totalorder %s47, %s48
    %p57 = scmp.eq.s32.totalorder %s16, 0
    %p58 = por %p56, %p57
    %p59 = scmp.ne.s32.totalorder %s47, %s48
    %p60 = scmp.eq.s32.totalorder %s17, 1
    %p61 = por %p59, %p60
    %p63 = scmp.ne.s32.totalorder %s48, %s62
    %p64 = scmp.eq.s32.totalorder %s17, 0
    %p65 = por %p63, %p64
    %s66 = ssub.s32 %s11, %s18
    %p67 = scmp.eq.s32.totalorder %s66, 0
    %s69 = sadd.s32 %s68, 1
    %s70 = scalar_select %p67, %s68, %s69
    %p73 = pneg %p67
    %p74 = scmp.eq.s32.totalorder %s11, 1
    %p75 = por %p73, %p74
    %p76 = scmp.ne.s32.totalorder %s68, %s71
    %p77 = scmp.eq.s32.totalorder %s11, 0
    %p78 = por %p76, %p77
    %p79 = scmp.ne.s32.totalorder %s68, %s71
    %p80 = scmp.eq.s32.totalorder %s16, 1
    %p81 = por %p79, %p80
    %p82 = scmp.ne.s32.totalorder %s71, %s72
    %p83 = scmp.eq.s32.totalorder %s16, 0
    %p84 = por %p82, %p83
    %p85 = scmp.ne.s32.totalorder %s71, %s72
    %p86 = scmp.eq.s32.totalorder %s17, 1
    %p87 = por %p85, %p86
    %p89 = scmp.ne.s32.totalorder %s72, %s88
    %p90 = scmp.eq.s32.totalorder %s17, 0
    %p91 = por %p89, %p90
    %s93 = sadd.s32 %s92, 1
    %p96 = scmp.eq.s32.totalorder %s11, 1
    %p97 = scmp.ne.s32.totalorder %s92, %s94
    %p98 = scmp.eq.s32.totalorder %s11, 0
    %p99 = por %p97, %p98
    %p100 = scmp.ne.s32.totalorder %s92, %s94
    %p101 = scmp.eq.s32.totalorder %s16, 1
    %p102 = por %p100, %p101
    %p103 = scmp.ne.s32.totalorder %s94, %s95
    %p104 = scmp.eq.s32.totalorder %s16, 0
    %p105 = por %p103, %p104
    %p106 = scmp.ne.s32.totalorder %s94, %s95
    %p107 = scmp.eq.s32.totalorder %s17, 1
    %p108 = por %p106, %p107
    %p110 = scmp.ne.s32.totalorder %s95, %s109
    %p111 = scmp.eq.s32.totalorder %s17, 0
    %p112 = por %p110, %p111
    %s114 = sadd.s32 %s113, 1
    %p117 = scmp.eq.s32.totalorder %s11, 1
    %p118 = scmp.ne.s32.totalorder %s113, %s115
    %p119 = scmp.eq.s32.totalorder %s11, 0
    %p120 = por %p118, %p119
    %p121 = scmp.ne.s32.totalorder %s113, %s115
    %p122 = scmp.eq.s32.totalorder %s16, 1
    %p123 = por %p121, %p122
    %p124 = scmp.ne.s32.totalorder %s115, %s116
    %p125 = scmp.eq.s32.totalorder %s16, 0
    %p126 = por %p124, %p125
    %p127 = scmp.ne.s32.totalorder %s115, %s116
    %p128 = scmp.eq.s32.totalorder %s17, 1
    %p129 = por %p127, %p128
    %p131 = scmp.ne.s32.totalorder %s116, %s130
    %p132 = scmp.eq.s32.totalorder %s17, 0
    %p133 = por %p131, %p132
    %p134 = scmp.le.s32.totalorder 1, %s11
    %p135 = scmp.lt.s32.totalorder %s11, 3
    %p136 = pnand %p134, %p135
    %p137 = pneg %p136
    // Predicated region
    $region9: #{apf_forward.14} parent=5 // pred_check
      _
    $region10: #{apf_forward.14} parent=5 // pred_check_branch
      %139 = sbr.rel (%p136) target = $region12
    $region11: #{apf_forward.14} parent=5 // pred_region
      %s140 = ssub.s32 %s11, 1
      // Predicated region
      $region13: #{apf_forward.14} parent=11 // pred_check
        %p141 = pneg %p58
      $region14: #{apf_forward.14} parent=11 // pred_check_branch
        %143 = sbr.rel (%p141) target = $region16
      $region15: #{apf_forward.14} parent=11 // pred_region
        _
      $region16: #{apf_forward.14} parent=11 // pred_fallthru
        _
    $region12: #{apf_forward.14} parent=5 // pred_fallthru
      _
    %p144 = scmp.lt.s32.totalorder %s11, 2
    // Predicated region
    $region17: #{apf_forward.14} parent=5 // pred_check
      %p145 = pneg %p144
    $region18: #{apf_forward.14} parent=5 // pred_check_branch
      %147 = sbr.rel (%p145) target = $region20
    $region19: #{apf_forward.14} parent=5 // pred_region
      // Predicated region
      $region21: #{apf_forward.14} parent=19 // pred_check
        %p148 = pneg %p31
      $region22: #{apf_forward.14} parent=19 // pred_check_branch
        %150 = sbr.rel (%p148) target = $region24
      $region23: #{apf_forward.14} parent=19 // pred_region
        %s151 = smul.u32 32, %s11
        %p152 = scmp.lt.s32.totalorder %s151, 63
        %s153 = scalar_select %p152, %s151, 63
        %s154 = smul.addr %s153, 4
        %s155 = scalar_lea.vmem %s0, %s154
        %s156 = smul.u32 32, %s11
      $region24: #{apf_forward.14} parent=19 // pred_fallthru
        _
    $region20: #{apf_forward.14} parent=5 // pred_fallthru
      _
    %p157 = scmp.le.s32.totalorder 1, %s11
    %p158 = scmp.lt.s32.totalorder %s11, 3
    %p159 = pnand %p157, %p158
    %p160 = pneg %p159
    // Predicated region
    $region25: #{apf_forward.14} parent=5 // pred_check
      _
    $region26: #{apf_forward.14} parent=5 // pred_check_branch
      %162 = sbr.rel (%p159) target = $region28
    $region27: #{apf_forward.14} parent=5 // pred_region
      %s163 = ssub.s32 %s11, 1
      %s164 = smul.u32 32, %s16
      %p165 = scmp.lt.s32.totalorder %s164, 63
      %s166 = scalar_select %p165, %s164, 63
      %s167 = smul.addr %s166, 4
      %s168 = scalar_lea.vmem %s0, %s167
      %p169 = pneg %p37
      %p170 = pneg %p34
      %p171 = pneg %p58
      %p172 = pneg %p55
      %p173 = pneg %p84
      %p174 = pneg %p81
      %s175 = smul.u32 32, %s16
      %p176 = scmp.lt.s32.totalorder %s175, 63
      %s177 = scalar_select %p176, %s175, 63
      %s178 = smul.addr %s177, 4
      %s179 = scalar_lea.vmem %s2, %s178
      %p180 = pneg %p105
      %p181 = pneg %p102
      %p182 = pneg %p126
      %p183 = pneg %p123
      %s184 = smul.u32 32, %s16
      %p185 = scmp.lt.s32.totalorder %s184, 63
      %s186 = scalar_select %p185, %s184, 63
      %s187 = smul.addr %s186, 4
      %s188 = scalar_lea.vmem %s0, %s187
      %s189 = smul.u32 32, %s16
      %s190 = smul.u32 32, %s16
      %p191 = scmp.lt.s32.totalorder %s190, 63
      %s192 = scalar_select %p191, %s190, 63
      %s193 = smul.addr %s192, 4
      %s194 = scalar_lea.vmem %s2, %s193
      %s195 = smul.u32 32, %s16
      %p197 = scmp.eq.s32.totalorder %s16, 0
      // Predicated region
      $region29: #{apf_forward.14} parent=27 // pred_check
        %p198 = pneg %p197
      $region30: #{apf_forward.14} parent=27 // pred_check_branch
        %200 = sbr.rel (%p198) target = $region32
      $region31: #{apf_forward.14} parent=27 // pred_region
        %201 = vst [vmem:[%s3] sm:$0x1] 0.0
        %202 = vst [vmem:[%s4] sm:$0x1] 0.0
      $region32: #{apf_forward.14} parent=27 // pred_fallthru
        _
      %v203 = vld [vmem:[%s188] sm:$0xf]
      %v204 = vld [vmem:[%s188 + $0x4] sm:$0xf]
      %v205 = vld [vmem:[%s188 + $0x8] sm:$0xf]
      %v206 = vld [vmem:[%s188 + $0xc] sm:$0xf]
      %v207 = vld [vmem:[%s188 + $0x10] sm:$0xf]
      %v208 = vld [vmem:[%s188 + $0x14] sm:$0xf]
      %v209 = vld [vmem:[%s188 + $0x18] sm:$0xf]
      %v210 = vld [vmem:[%s188 + $0x1c] sm:$0xf]
      %v211 = vld [vmem:[%s188 + $0x20] sm:$0xf]
      %v212 = vld [vmem:[%s188 + $0x24] sm:$0xf]
      %v213 = vld [vmem:[%s188 + $0x28] sm:$0xf]
      %v214 = vld [vmem:[%s188 + $0x2c] sm:$0xf]
      %v215 = vld [vmem:[%s188 + $0x30] sm:$0xf]
      %v216 = vld [vmem:[%s188 + $0x34] sm:$0xf]
      %v217 = vld [vmem:[%s188 + $0x38] sm:$0xf]
      %v218 = vld [vmem:[%s188 + $0x3c] sm:$0xf]
      %v219 = vld [vmem:[%s188 + $0x40] sm:$0xf]
      %v220 = vld [vmem:[%s188 + $0x44] sm:$0xf]
      %v221 = vld [vmem:[%s188 + $0x48] sm:$0xf]
      %v222 = vld [vmem:[%s188 + $0x4c] sm:$0xf]
      %v223 = vld [vmem:[%s188 + $0x50] sm:$0xf]
      %v224 = vld [vmem:[%s188 + $0x54] sm:$0xf]
      %v225 = vld [vmem:[%s188 + $0x58] sm:$0xf]
      %v226 = vld [vmem:[%s188 + $0x5c] sm:$0xf]
      %v227 = vld [vmem:[%s188 + $0x60] sm:$0xf]
      %v228 = vld [vmem:[%s188 + $0x64] sm:$0xf]
      %v229 = vld [vmem:[%s188 + $0x68] sm:$0xf]
      %v230 = vld [vmem:[%s188 + $0x6c] sm:$0xf]
      %v231 = vld [vmem:[%s188 + $0x70] sm:$0xf]
      %v232 = vld [vmem:[%s188 + $0x74] sm:$0xf]
      %v233 = vld [vmem:[%s188 + $0x78] sm:$0xf]
      %v234 = vld [vmem:[%s188 + $0x7c] sm:$0xf]
      %v235 = vld [vmem:[%s1] sm:$0xf]
      %v236 = vld [vmem:[%s1 + $0x4] sm:$0xf]
      %v237 = vld [vmem:[%s1 + $0x8] sm:$0xf]
      %v238 = vld [vmem:[%s1 + $0xc] sm:$0xf]
      %v239 = vld [vmem:[%s1 + $0x10] sm:$0xf]
      %v240 = vld [vmem:[%s1 + $0x14] sm:$0xf]
      %v241 = vld [vmem:[%s1 + $0x18] sm:$0xf]
      %v242 = vld [vmem:[%s1 + $0x1c] sm:$0xf]
      %v243 = vld [vmem:[%s1 + $0x20] sm:$0xf]
      %v244 = vld [vmem:[%s1 + $0x24] sm:$0xf]
      %v245 = vld [vmem:[%s1 + $0x28] sm:$0xf]
      %v246 = vld [vmem:[%s1 + $0x2c] sm:$0xf]
      %v247 = vld [vmem:[%s1 + $0x30] sm:$0xf]
      %v248 = vld [vmem:[%s1 + $0x34] sm:$0xf]
      %v249 = vld [vmem:[%s1 + $0x38] sm:$0xf]
      %v250 = vld [vmem:[%s1 + $0x3c] sm:$0xf]
      %v283 = vunpack.c.l.b16 %v203
      %v284 = vunpack.c.l.b16 %v204
      %v285 = vunpack.c.l.b16 %v205
      %v286 = vunpack.c.l.b16 %v206
      %v287 = vunpack.c.l.b16 %v207
      %v288 = vunpack.c.l.b16 %v208
      %v289 = vunpack.c.l.b16 %v209
      %v290 = vunpack.c.l.b16 %v210
      %v291 = vunpack.c.l.b16 %v211
      %v292 = vunpack.c.l.b16 %v212
      %v293 = vunpack.c.l.b16 %v213
      %v294 = vunpack.c.l.b16 %v214
      %v295 = vunpack.c.l.b16 %v215
      %v296 = vunpack.c.l.b16 %v216
      %v297 = vunpack.c.l.b16 %v217
      %v298 = vunpack.c.l.b16 %v218
      %v299 = vunpack.c.l.b16 %v219
      %v300 = vunpack.c.l.b16 %v220
      %v301 = vunpack.c.l.b16 %v221
      %v302 = vunpack.c.l.b16 %v222
      %v303 = vunpack.c.l.b16 %v223
      %v304 = vunpack.c.l.b16 %v224
      %v305 = vunpack.c.l.b16 %v225
      %v306 = vunpack.c.l.b16 %v226
      %v307 = vunpack.c.l.b16 %v227
      %v308 = vunpack.c.l.b16 %v228
      %v309 = vunpack.c.l.b16 %v229
      %v310 = vunpack.c.l.b16 %v230
      %v311 = vunpack.c.l.b16 %v231
      %v312 = vunpack.c.l.b16 %v232
      %v313 = vunpack.c.l.b16 %v233
      %v314 = vunpack.c.l.b16 %v234
      %v315 = vpack.c.b16 %v284, %v283
      %v316 = vpack.c.b16 %v286, %v285
      %v317 = vpack.c.b16 %v288, %v287
      %v318 = vpack.c.b16 %v290, %v289
      %v319 = vpack.c.b16 %v292, %v291
      %v320 = vpack.c.b16 %v294, %v293
      %v321 = vpack.c.b16 %v296, %v295
      %v322 = vpack.c.b16 %v298, %v297
      %v323 = vpack.c.b16 %v300, %v299
      %v324 = vpack.c.b16 %v302, %v301
      %v325 = vpack.c.b16 %v304, %v303
      %v326 = vpack.c.b16 %v306, %v305
      %v327 = vpack.c.b16 %v308, %v307
      %v328 = vpack.c.b16 %v310, %v309
      %v329 = vpack.c.b16 %v312, %v311
      %v330 = vpack.c.b16 %v314, %v313
      %v363 = vunpack.c.l.b16 %v235
      %v364 = vunpack.c.l.b16 %v236
      %v365 = vunpack.c.l.b16 %v237
      %v366 = vunpack.c.l.b16 %v238
      %v367 = vunpack.c.l.b16 %v239
      %v368 = vunpack.c.l.b16 %v240
      %v369 = vunpack.c.l.b16 %v241
      %v370 = vunpack.c.l.b16 %v242
      %v371 = vunpack.c.l.b16 %v243
      %v372 = vunpack.c.l.b16 %v244
      %v373 = vunpack.c.l.b16 %v245
      %v374 = vunpack.c.l.b16 %v246
      %v375 = vunpack.c.l.b16 %v247
      %v376 = vunpack.c.l.b16 %v248
      %v377 = vunpack.c.l.b16 %v249
      %v378 = vunpack.c.l.b16 %v250
      %v379 = vpack.c.b16 %v364, %v363
      %v380 = vpack.c.b16 %v366, %v365
      %v381 = vpack.c.b16 %v368, %v367
      %v382 = vpack.c.b16 %v370, %v369
      %v383 = vpack.c.b16 %v372, %v371
      %v384 = vpack.c.b16 %v374, %v373
      %v385 = vpack.c.b16 %v376, %v375
      %v386 = vpack.c.b16 %v378, %v377
      %395 = vmatprep.subr.bf16.mxu0 0
      %396 = vmatpush1.bf16.msra.mxu0 %v379
      %397 = vmatprep.subr.bf16.mxu0 0
      %398 = vmatpush1.bf16.msra.mxu0 %v380
      %399 = vmatprep.subr.bf16.mxu0 0
      %400 = vmatpush1.bf16.msra.mxu0 %v381
      %401 = vmatprep.subr.bf16.mxu0 0
      %402 = vmatpush1.bf16.msra.mxu0 %v382
      %403 = vmatprep.subr.bf16.mxu0 0
      %404 = vmatpush1.bf16.msra.mxu0 %v383
      %405 = vmatprep.subr.bf16.mxu0 0
      %406 = vmatpush1.bf16.msra.mxu0 %v384
      %407 = vmatprep.subr.bf16.mxu0 0
      %408 = vmatpush1.bf16.msra.mxu0 %v385
      %409 = vmatprep.subr.bf16.mxu0 0
      %410 = vmatpush1.bf16.msra.mxu0 %v386
      %411 = vmatprep.subr.bf16.mxu0 0
      %412 = vmatpush1.bf16.msra.mxu0 0
      %413 = vmatprep.subr.bf16.mxu0 0
      %414 = vmatpush1.bf16.msra.mxu0 0
      %415 = vmatprep.subr.bf16.mxu0 0
      %416 = vmatpush1.bf16.msra.mxu0 0
      %417 = vmatprep.subr.bf16.mxu0 0
      %418 = vmatpush1.bf16.msra.mxu0 0
      %419 = vmatprep.subr.bf16.mxu0 0
      %420 = vmatpush1.bf16.msra.mxu0 0
      %421 = vmatprep.subr.bf16.mxu0 0
      %422 = vmatpush1.bf16.msra.mxu0 0
      %423 = vmatprep.subr.bf16.mxu0 0
      %424 = vmatpush1.bf16.msra.mxu0 0
      %425 = vmatprep.subr.bf16.mxu0 0
      %426 = vmatpush1.bf16.msra.mxu0 0
      %427 = vmatprep.mubr.bf16.mxu0 0
      %428 = vmatmul.mubr.bf16.gmra.mrb[0].mxu0 %v315
      %v429 = vpop.f32.mrb[0].mxu0
      %v430 = vadd.f32 0.0, %v429
      %v431 = vpop.f32.mrb[0].mxu0
      %v432 = vpop.f32.mrb[0].mxu0
      %v433 = vadd.f32 0.0, %v432
      %v434 = vpop.f32.mrb[0].mxu0
      %435 = vmatprep.mubr.bf16.mxu0 0
      %436 = vmatmul.mubr.bf16.gmra.mrb[0].mxu0 %v316
      %v437 = vpop.f32.mrb[0].mxu0
      %v438 = vadd.f32 0.0, %v437
      %v439 = vpop.f32.mrb[0].mxu0
      %v440 = vpop.f32.mrb[0].mxu0
      %v441 = vadd.f32 0.0, %v440
      %v442 = vpop.f32.mrb[0].mxu0
      %443 = vmatprep.mubr.bf16.mxu0 0
      %444 = vmatmul.mubr.bf16.gmra.mrb[0].mxu0 %v317
      %v445 = vpop.f32.mrb[0].mxu0
      %v446 = vadd.f32 0.0, %v445
      %v447 = vpop.f32.mrb[0].mxu0
      %v448 = vpop.f32.mrb[0].mxu0
      %v449 = vadd.f32 0.0, %v448
      %v450 = vpop.f32.mrb[0].mxu0
      %451 = vmatprep.mubr.bf16.mxu0 0
      %452 = vmatmul.mubr.bf16.gmra.mrb[0].mxu0 %v318
      %v453 = vpop.f32.mrb[0].mxu0
      %v454 = vadd.f32 0.0, %v453
      %v455 = vpop.f32.mrb[0].mxu0
      %v456 = vpop.f32.mrb[0].mxu0
      %v457 = vadd.f32 0.0, %v456
      %v458 = vpop.f32.mrb[0].mxu0
      %459 = vmatprep.mubr.bf16.mxu0 0
      %460 = vmatmul.mubr.bf16.gmra.mrb[0].mxu0 %v319
      %v461 = vpop.f32.mrb[0].mxu0
      %v462 = vadd.f32 0.0, %v461
      %v463 = vpop.f32.mrb[0].mxu0
      %v464 = vpop.f32.mrb[0].mxu0
      %v465 = vadd.f32 0.0, %v464
      %v466 = vpop.f32.mrb[0].mxu0
      %467 = vmatprep.mubr.bf16.mxu0 0
      %468 = vmatmul.mubr.bf16.gmra.mrb[0].mxu0 %v320
      %v469 = vpop.f32.mrb[0].mxu0
      %v470 = vadd.f32 0.0, %v469
      %v471 = vpop.f32.mrb[0].mxu0
      %v472 = vpop.f32.mrb[0].mxu0
      %v473 = vadd.f32 0.0, %v472
      %v474 = vpop.f32.mrb[0].mxu0
      %475 = vmatprep.mubr.bf16.mxu0 0
      %476 = vmatmul.mubr.bf16.gmra.mrb[0].mxu0 %v321
      %v477 = vpop.f32.mrb[0].mxu0
      %v478 = vadd.f32 0.0, %v477
      %v479 = vpop.f32.mrb[0].mxu0
      %v480 = vpop.f32.mrb[0].mxu0
      %v481 = vadd.f32 0.0, %v480
      %v482 = vpop.f32.mrb[0].mxu0
      %483 = vmatprep.mubr.bf16.mxu0 0
      %484 = vmatmul.mubr.bf16.gmra.mrb[0].mxu0 %v322
      %v485 = vpop.f32.mrb[0].mxu0
      %v486 = vadd.f32 0.0, %v485
      %v487 = vpop.f32.mrb[0].mxu0
      %v488 = vpop.f32.mrb[0].mxu0
      %v489 = vadd.f32 0.0, %v488
      %v490 = vpop.f32.mrb[0].mxu0
      %491 = vmatprep.mubr.bf16.mxu0 0
      %492 = vmatmul.mubr.bf16.gmra.mrb[0].mxu0 %v323
      %v493 = vpop.f32.mrb[0].mxu0
      %v494 = vadd.f32 0.0, %v493
      %v495 = vpop.f32.mrb[0].mxu0
      %v496 = vpop.f32.mrb[0].mxu0
      %v497 = vadd.f32 0.0, %v496
      %v498 = vpop.f32.mrb[0].mxu0
      %499 = vmatprep.mubr.bf16.mxu0 0
      %500 = vmatmul.mubr.bf16.gmra.mrb[0].mxu0 %v324
      %v501 = vpop.f32.mrb[0].mxu0
      %v502 = vadd.f32 0.0, %v501
      %v503 = vpop.f32.mrb[0].mxu0
      %v504 = vpop.f32.mrb[0].mxu0
      %v505 = vadd.f32 0.0, %v504
      %v506 = vpop.f32.mrb[0].mxu0
      %507 = vmatprep.mubr.bf16.mxu0 0
      %508 = vmatmul.mubr.bf16.gmra.mrb[0].mxu0 %v325
      %v509 = vpop.f32.mrb[0].mxu0
      %v510 = vadd.f32 0.0, %v509
      %v511 = vpop.f32.mrb[0].mxu0
      %v512 = vpop.f32.mrb[0].mxu0
      %v513 = vadd.f32 0.0, %v512
      %v514 = vpop.f32.mrb[0].mxu0
      %515 = vmatprep.mubr.bf16.mxu0 0
      %516 = vmatmul.mubr.bf16.gmra.mrb[0].mxu0 %v326
      %v517 = vpop.f32.mrb[0].mxu0
      %v518 = vadd.f32 0.0, %v517
      %v519 = vpop.f32.mrb[0].mxu0
      %v520 = vpop.f32.mrb[0].mxu0
      %v521 = vadd.f32 0.0, %v520
      %v522 = vpop.f32.mrb[0].mxu0
      %523 = vmatprep.mubr.bf16.mxu0 0
      %524 = vmatmul.mubr.bf16.gmra.mrb[0].mxu0 %v327
      %v525 = vpop.f32.mrb[0].mxu0
      %v526 = vadd.f32 0.0, %v525
      %v527 = vpop.f32.mrb[0].mxu0
      %v528 = vpop.f32.mrb[0].mxu0
      %v529 = vadd.f32 0.0, %v528
      %v530 = vpop.f32.mrb[0].mxu0
      %531 = vmatprep.mubr.bf16.mxu0 0
      %532 = vmatmul.mubr.bf16.gmra.mrb[0].mxu0 %v328
      %v533 = vpop.f32.mrb[0].mxu0
      %v534 = vadd.f32 0.0, %v533
      %v535 = vpop.f32.mrb[0].mxu0
      %v536 = vpop.f32.mrb[0].mxu0
      %v537 = vadd.f32 0.0, %v536
      %v538 = vpop.f32.mrb[0].mxu0
      %539 = vmatprep.mubr.bf16.mxu0 0
      %540 = vmatmul.mubr.bf16.gmra.mrb[0].mxu0 %v329
      %v541 = vpop.f32.mrb[0].mxu0
      %v542 = vadd.f32 0.0, %v541
      %v543 = vpop.f32.mrb[0].mxu0
      %v544 = vpop.f32.mrb[0].mxu0
      %v545 = vadd.f32 0.0, %v544
      %v546 = vpop.f32.mrb[0].mxu0
      %547 = vmatprep.mubr.bf16.mxu0 0
      %548 = vmatmul.mubr.bf16.gmra.mrb[0].mxu0 %v330
      %v549 = vpop.f32.mrb[0].mxu0
      %v550 = vadd.f32 0.0, %v549
      %v551 = vpop.f32.mrb[0].mxu0
      %v552 = vpop.f32.mrb[0].mxu0
      %v553 = vadd.f32 0.0, %v552
      %v554 = vpop.f32.mrb[0].mxu0
      %555 = vdwg.mxu0
      %v556 = vpack.c.bf16 %v433, %v430
      %v557 = vpack.c.bf16 %v441, %v438
      %v558 = vpack.c.bf16 %v449, %v446
      %v559 = vpack.c.bf16 %v457, %v454
      %v560 = vpack.c.bf16 %v465, %v462
      %v561 = vpack.c.bf16 %v473, %v470
      %v562 = vpack.c.bf16 %v481, %v478
      %v563 = vpack.c.bf16 %v489, %v486
      %v564 = vpack.c.bf16 %v497, %v494
      %v565 = vpack.c.bf16 %v505, %v502
      %v566 = vpack.c.bf16 %v513, %v510
      %v567 = vpack.c.bf16 %v521, %v518
      %v568 = vpack.c.bf16 %v529, %v526
      %v569 = vpack.c.bf16 %v537, %v534
      %v570 = vpack.c.bf16 %v545, %v542
      %v571 = vpack.c.bf16 %v553, %v550
      %v588 = vunpack.c.l.b16 %v556
      %v589 = vunpack.c.h.b16 %v556
      %v590 = vunpack.c.l.b16 %v557
      %v591 = vunpack.c.h.b16 %v557
      %v592 = vunpack.c.l.b16 %v558
      %v593 = vunpack.c.h.b16 %v558
      %v594 = vunpack.c.l.b16 %v559
      %v595 = vunpack.c.h.b16 %v559
      %v596 = vunpack.c.l.b16 %v560
      %v597 = vunpack.c.h.b16 %v560
      %v598 = vunpack.c.l.b16 %v561
      %v599 = vunpack.c.h.b16 %v561
      %v600 = vunpack.c.l.b16 %v562
      %v601 = vunpack.c.h.b16 %v562
      %v602 = vunpack.c.l.b16 %v563
      %v603 = vunpack.c.h.b16 %v563
      %v604 = vunpack.c.l.b16 %v564
      %v605 = vunpack.c.h.b16 %v564
      %v606 = vunpack.c.l.b16 %v565
      %v607 = vunpack.c.h.b16 %v565
      %v608 = vunpack.c.l.b16 %v566
      %v609 = vunpack.c.h.b16 %v566
      %v610 = vunpack.c.l.b16 %v567
      %v611 = vunpack.c.h.b16 %v567
      %v612 = vunpack.c.l.b16 %v568
      %v613 = vunpack.c.h.b16 %v568
      %v614 = vunpack.c.l.b16 %v569
      %v615 = vunpack.c.h.b16 %v569
      %v616 = vunpack.c.l.b16 %v570
      %v617 = vunpack.c.h.b16 %v570
      %v618 = vunpack.c.l.b16 %v571
      %v619 = vunpack.c.h.b16 %v571
      %v620 = vpack.c.b16 %v588, %v588
      %v621 = vpack.c.b16 %v589, %v589
      %v622 = vpack.c.b16 %v590, %v590
      %v623 = vpack.c.b16 %v591, %v591
      %v624 = vpack.c.b16 %v592, %v592
      %v625 = vpack.c.b16 %v593, %v593
      %v626 = vpack.c.b16 %v594, %v594
      %v627 = vpack.c.b16 %v595, %v595
      %v628 = vpack.c.b16 %v596, %v596
      %v629 = vpack.c.b16 %v597, %v597
      %v630 = vpack.c.b16 %v598, %v598
      %v631 = vpack.c.b16 %v599, %v599
      %v632 = vpack.c.b16 %v600, %v600
      %v633 = vpack.c.b16 %v601, %v601
      %v634 = vpack.c.b16 %v602, %v602
      %v635 = vpack.c.b16 %v603, %v603
      %v636 = vpack.c.b16 %v604, %v604
      %v637 = vpack.c.b16 %v605, %v605
      %v638 = vpack.c.b16 %v606, %v606
      %v639 = vpack.c.b16 %v607, %v607
      %v640 = vpack.c.b16 %v608, %v608
      %v641 = vpack.c.b16 %v609, %v609
      %v642 = vpack.c.b16 %v610, %v610
      %v643 = vpack.c.b16 %v611, %v611
      %v644 = vpack.c.b16 %v612, %v612
      %v645 = vpack.c.b16 %v613, %v613
      %v646 = vpack.c.b16 %v614, %v614
      %v647 = vpack.c.b16 %v615, %v615
      %v648 = vpack.c.b16 %v616, %v616
      %v649 = vpack.c.b16 %v617, %v617
      %v650 = vpack.c.b16 %v618, %v618
      %v651 = vpack.c.b16 %v619, %v619
      %684 = vst [vmem:[%s194] sm:$0xf] %v620
      %685 = vst [vmem:[%s194 + $0x4] sm:$0xf] %v621
      %686 = vst [vmem:[%s194 + $0x8] sm:$0xf] %v622
      %687 = vst [vmem:[%s194 + $0xc] sm:$0xf] %v623
      %688 = vst [vmem:[%s194 + $0x10] sm:$0xf] %v624
      %689 = vst [vmem:[%s194 + $0x14] sm:$0xf] %v625
      %690 = vst [vmem:[%s194 + $0x18] sm:$0xf] %v626
      %691 = vst [vmem:[%s194 + $0x1c] sm:$0xf] %v627
      %692 = vst [vmem:[%s194 + $0x20] sm:$0xf] %v628
      %693 = vst [vmem:[%s194 + $0x24] sm:$0xf] %v629
      %694 = vst [vmem:[%s194 + $0x28] sm:$0xf] %v630
      %695 = vst [vmem:[%s194 + $0x2c] sm:$0xf] %v631
      %696 = vst [vmem:[%s194 + $0x30] sm:$0xf] %v632
      %697 = vst [vmem:[%s194 + $0x34] sm:$0xf] %v633
      %698 = vst [vmem:[%s194 + $0x38] sm:$0xf] %v634
      %699 = vst [vmem:[%s194 + $0x3c] sm:$0xf] %v635
      %700 = vst [vmem:[%s194 + $0x40] sm:$0xf] %v636
      %701 = vst [vmem:[%s194 + $0x44] sm:$0xf] %v637
      %702 = vst [vmem:[%s194 + $0x48] sm:$0xf] %v638
      %703 = vst [vmem:[%s194 + $0x4c] sm:$0xf] %v639
      %704 = vst [vmem:[%s194 + $0x50] sm:$0xf] %v640
      %705 = vst [vmem:[%s194 + $0x54] sm:$0xf] %v641
      %706 = vst [vmem:[%s194 + $0x58] sm:$0xf] %v642
      %707 = vst [vmem:[%s194 + $0x5c] sm:$0xf] %v643
      %708 = vst [vmem:[%s194 + $0x60] sm:$0xf] %v644
      %709 = vst [vmem:[%s194 + $0x64] sm:$0xf] %v645
      %710 = vst [vmem:[%s194 + $0x68] sm:$0xf] %v646
      %711 = vst [vmem:[%s194 + $0x6c] sm:$0xf] %v647
      %712 = vst [vmem:[%s194 + $0x70] sm:$0xf] %v648
      %713 = vst [vmem:[%s194 + $0x74] sm:$0xf] %v649
      %714 = vst [vmem:[%s194 + $0x78] sm:$0xf] %v650
      %715 = vst [vmem:[%s194 + $0x7c] sm:$0xf] %v651
      %v716 = vld [vmem:[%s3] sm:$0x1]
      %v717 = vadd.f32 %v430, %v433
      %v718 = vadd.f32 %v717, %v438
      %v719 = vadd.f32 %v718, %v441
      %v720 = vadd.f32 %v719, %v446
      %v721 = vadd.f32 %v720, %v449
      %v722 = vadd.f32 %v721, %v454
      %v723 = vadd.f32 %v722, %v457
      %v724 = vadd.f32 %v723, %v462
      %v725 = vadd.f32 %v724, %v465
      %v726 = vadd.f32 %v725, %v470
      %v727 = vadd.f32 %v726, %v473
      %v728 = vadd.f32 %v727, %v478
      %v729 = vadd.f32 %v728, %v481
      %v730 = vadd.f32 %v729, %v486
      %v731 = vadd.f32 %v730, %v489
      %v732 = vadd.f32 %v731, %v494
      %v733 = vadd.f32 %v732, %v497
      %v734 = vadd.f32 %v733, %v502
      %v735 = vadd.f32 %v734, %v505
      %v736 = vadd.f32 %v735, %v510
      %v737 = vadd.f32 %v736, %v513
      %v738 = vadd.f32 %v737, %v518
      %v739 = vadd.f32 %v738, %v521
      %v740 = vadd.f32 %v739, %v526
      %v741 = vadd.f32 %v740, %v529
      %v742 = vadd.f32 %v741, %v534
      %v743 = vadd.f32 %v742, %v537
      %v744 = vadd.f32 %v743, %v542
      %v745 = vadd.f32 %v744, %v545
      %v746 = vadd.f32 %v745, %v550
      %v747 = vadd.f32 %v746, %v553
      %v748 = vrot.slane %v747, 4
      %v749 = vadd.f32 %v747, %v748
      %v750 = vrot.slane %v749, 2
      %v751 = vadd.f32 %v749, %v750
      %v752 = vrot.slane %v751, 1
      %v753 = vadd.f32 %v751, %v752
      %v754 = vadd.f32 %v716, %v753
      %755 = vst [vmem:[%s3] sm:$0x1] %v754
      %v756 = vld [vmem:[%s4] sm:$0x1]
      %v757 = vmul.f32 %v430, %v430
      %v758 = vmul.f32 %v433, %v433
      %v759 = vmul.f32 %v438, %v438
      %v760 = vmul.f32 %v441, %v441
      %v761 = vmul.f32 %v446, %v446
      %v762 = vmul.f32 %v449, %v449
      %v763 = vmul.f32 %v454, %v454
      %v764 = vmul.f32 %v457, %v457
      %v765 = vmul.f32 %v462, %v462
      %v766 = vmul.f32 %v465, %v465
      %v767 = vmul.f32 %v470, %v470
      %v768 = vmul.f32 %v473, %v473
      %v769 = vmul.f32 %v478, %v478
      %v770 = vmul.f32 %v481, %v481
      %v771 = vmul.f32 %v486, %v486
      %v772 = vmul.f32 %v489, %v489
      %v773 = vmul.f32 %v494, %v494
      %v774 = vmul.f32 %v497, %v497
      %v775 = vmul.f32 %v502, %v502
      %v776 = vmul.f32 %v505, %v505
      %v777 = vmul.f32 %v510, %v510
      %v778 = vmul.f32 %v513, %v513
      %v779 = vmul.f32 %v518, %v518
      %v780 = vmul.f32 %v521, %v521
      %v781 = vmul.f32 %v526, %v526
      %v782 = vmul.f32 %v529, %v529
      %v783 = vmul.f32 %v534, %v534
      %v784 = vmul.f32 %v537, %v537
      %v785 = vmul.f32 %v542, %v542
      %v786 = vmul.f32 %v545, %v545
      %v787 = vmul.f32 %v550, %v550
      %v788 = vmul.f32 %v553, %v553
      %v789 = vadd.f32 %v757, %v758
      %v790 = vadd.f32 %v789, %v759
      %v791 = vadd.f32 %v790, %v760
      %v792 = vadd.f32 %v791, %v761
      %v793 = vadd.f32 %v792, %v762
      %v794 = vadd.f32 %v793, %v763
      %v795 = vadd.f32 %v794, %v764
      %v796 = vadd.f32 %v795, %v765
      %v797 = vadd.f32 %v796, %v766
      %v798 = vadd.f32 %v797, %v767
      %v799 = vadd.f32 %v798, %v768
      %v800 = vadd.f32 %v799, %v769
      %v801 = vadd.f32 %v800, %v770
      %v802 = vadd.f32 %v801, %v771
      %v803 = vadd.f32 %v802, %v772
      %v804 = vadd.f32 %v803, %v773
      %v805 = vadd.f32 %v804, %v774
      %v806 = vadd.f32 %v805, %v775
      %v807 = vadd.f32 %v806, %v776
      %v808 = vadd.f32 %v807, %v777
      %v809 = vadd.f32 %v808, %v778
      %v810 = vadd.f32 %v809, %v779
      %v811 = vadd.f32 %v810, %v780
      %v812 = vadd.f32 %v811, %v781
      %v813 = vadd.f32 %v812, %v782
      %v814 = vadd.f32 %v813, %v783
      %v815 = vadd.f32 %v814, %v784
      %v816 = vadd.f32 %v815, %v785
      %v817 = vadd.f32 %v816, %v786
      %v818 = vadd.f32 %v817, %v787
      %v819 = vadd.f32 %v818, %v788
      %v820 = vrot.slane %v819, 4
      %v821 = vadd.f32 %v819, %v820
      %v822 = vrot.slane %v821, 2
      %v823 = vadd.f32 %v821, %v822
      %v824 = vrot.slane %v823, 1
      %v825 = vadd.f32 %v823, %v824
      %v826 = vadd.f32 %v756, %v825
      %827 = vst [vmem:[%s4] sm:$0x1] %v826
      %s828 = smul.u32 32, %s16
      %p829 = scmp.lt.s32.totalorder %s828, 63
      %s830 = scalar_select %p829, %s828, 63
      %s831 = smul.addr %s830, 4
      %s832 = scalar_lea.vmem %s2, %s831
      // Predicated region
      $region33: #{apf_forward.14} parent=27 // pred_check
        %p833 = pneg %p81
      $region34: #{apf_forward.14} parent=27 // pred_check_branch
        %835 = sbr.rel (%p833) target = $region36
      $region35: #{apf_forward.14} parent=27 // pred_region
        %s836 = smul.u32 32, %s16
      $region36: #{apf_forward.14} parent=27 // pred_fallthru
        _
      // Predicated region
      $region37: #{apf_forward.14} parent=27 // pred_check
        %p837 = pneg %p102
      $region38: #{apf_forward.14} parent=27 // pred_check_branch
        %839 = sbr.rel (%p837) target = $region40
      $region39: #{apf_forward.14} parent=27 // pred_region
        _
      $region40: #{apf_forward.14} parent=27 // pred_fallthru
        _
      // Predicated region
      $region41: #{apf_forward.14} parent=27 // pred_check
        %p840 = pneg %p123
      $region42: #{apf_forward.14} parent=27 // pred_check_branch
        %842 = sbr.rel (%p840) target = $region44
      $region43: #{apf_forward.14} parent=27 // pred_region
        _
      $region44: #{apf_forward.14} parent=27 // pred_fallthru
        _
      // Predicated region
      $region45: #{apf_forward.14} parent=27 // pred_check
        %p843 = pneg %p102
      $region46: #{apf_forward.14} parent=27 // pred_check_branch
        %845 = sbr.rel (%p843) target = $region48
      $region47: #{apf_forward.14} parent=27 // pred_region
        _
      $region48: #{apf_forward.14} parent=27 // pred_fallthru
        _
      // Predicated region
      $region49: #{apf_forward.14} parent=27 // pred_check
        %p846 = pneg %p123
      $region50: #{apf_forward.14} parent=27 // pred_check_branch
        %848 = sbr.rel (%p846) target = $region52
      $region51: #{apf_forward.14} parent=27 // pred_region
        _
      $region52: #{apf_forward.14} parent=27 // pred_fallthru
        _
    $region28: #{apf_forward.14} parent=5 // pred_fallthru
      _
    %p849 = scmp.le.s32.totalorder 2, %s11
    // Predicated region
    $region53: #{apf_forward.14} parent=5 // pred_check
      %p850 = pneg %p849
    $region54: #{apf_forward.14} parent=5 // pred_check_branch
      %852 = sbr.rel (%p850) target = $region56
    $region55: #{apf_forward.14} parent=5 // pred_region
      %s853 = ssub.s32 %s11, 2
      // Predicated region
      $region57: #{apf_forward.14} parent=55 // pred_check
        %p854 = pneg %p87
      $region58: #{apf_forward.14} parent=55 // pred_check_branch
        %856 = sbr.rel (%p854) target = $region60
      $region59: #{apf_forward.14} parent=55 // pred_region
        %s857 = smul.u32 32, %s17
        %p858 = scmp.lt.s32.totalorder %s857, 63
        %s859 = scalar_select %p858, %s857, 63
        %s860 = smul.addr %s859, 4
        %s861 = scalar_lea.vmem %s2, %s860
      $region60: #{apf_forward.14} parent=55 // pred_fallthru
        _
    $region56: #{apf_forward.14} parent=5 // pred_fallthru
      _
  $region6: #{apf_forward.14} parent=0 // loop_footer
    %s15 = sadd.s32 1, %s11
  $region7: #{apf_forward.14} parent=0 // loop_footer_branch
    %10 = sbr.rel target = $region3
  $region8: #{apf_forward.14} parent=0 // loop_exit
    _

// kernel: apf_forward.15
$region0: #{apf_forward.15}
  #allocation0 [shape = 'u32[]', space=smem, size = 0x4, offset = 0x4, fixed_abs, tag = 'smem constant byte address 0x4 - core index']
  #allocation1 [shape = 'u32[144,128]{1,0:T(1,128)}', space=vmem, size = 0x12000, scoped, tag = 'internal scratch']
  %s0 = inlined_call_operand.vmem [shape: bf16[512,128], index: 0, kind: input, shape index: {}, may-alias: {0,3}]
  %s1 = inlined_call_operand.vmem [shape: f32[1,128], index: 1, kind: input, shape index: {}]
  %s2 = inlined_call_operand.vmem [shape: f32[1,128], index: 2, kind: input, shape index: {}]
  %s3 = inlined_call_operand.vmem [shape: bf16[512,128], index: 3, kind: output, shape index: {}, may-alias: {0,3}]
  %s4 = sld [smem:[#allocation0]]
  $region22: #{apf_forward.15} parent=0
    _
  %s6 = ssub.s32 1, %s4
  %s7 = scalar_select 0, %s6, %s4
  // Predicated region
  $region2: #{apf_forward.15} parent=0 // pred_check
    _
  $region3: #{apf_forward.15} parent=0 // pred_check_branch
    %9 = sbr.rel (0) target = $region5
  $region4: #{apf_forward.15} parent=0 // pred_region
    _
  $region5: #{apf_forward.15} parent=0 // pred_fallthru
    _
  // Predicated region
  $region6: #{apf_forward.15} parent=0 // pred_check
    _
  $region7: #{apf_forward.15} parent=0 // pred_check_branch
    %11 = sbr.rel (0) target = $region9
  $region8: #{apf_forward.15} parent=0 // pred_region
    _
  $region9: #{apf_forward.15} parent=0 // pred_fallthru
    _
  // Predicated region
  $region10: #{apf_forward.15} parent=0 // pred_check
    _
  $region11: #{apf_forward.15} parent=0 // pred_check_branch
    %13 = sbr.rel (0) target = $region13
  $region12: #{apf_forward.15} parent=0 // pred_region
    _
  $region13: #{apf_forward.15} parent=0 // pred_fallthru
    _
  %v14 = vld [vmem:[%s0] sm:$0xf]
  %v15 = vld [vmem:[%s0 + $0x4] sm:$0xf]
  %v16 = vld [vmem:[%s0 + $0x8] sm:$0xf]
  %v17 = vld [vmem:[%s0 + $0xc] sm:$0xf]
  %v18 = vld [vmem:[%s0 + $0x10] sm:$0xf]
  %v19 = vld [vmem:[%s0 + $0x14] sm:$0xf]
  %v20 = vld [vmem:[%s0 + $0x18] sm:$0xf]
  %v21 = vld [vmem:[%s0 + $0x1c] sm:$0xf]
  %v22 = vld [vmem:[%s0 + $0x20] sm:$0xf]
  %v23 = vld [vmem:[%s0 + $0x24] sm:$0xf]
  %v24 = vld [vmem:[%s0 + $0x28] sm:$0xf]
  %v25 = vld [vmem:[%s0 + $0x2c] sm:$0xf]
  %v26 = vld [vmem:[%s0 + $0x30] sm:$0xf]
  %v27 = vld [vmem:[%s0 + $0x34] sm:$0xf]
  %v28 = vld [vmem:[%s0 + $0x38] sm:$0xf]
  %v29 = vld [vmem:[%s0 + $0x3c] sm:$0xf]
  %v30 = vld [vmem:[%s0 + $0x40] sm:$0xf]
  %v31 = vld [vmem:[%s0 + $0x44] sm:$0xf]
  %v32 = vld [vmem:[%s0 + $0x48] sm:$0xf]
  %v33 = vld [vmem:[%s0 + $0x4c] sm:$0xf]
  %v34 = vld [vmem:[%s0 + $0x50] sm:$0xf]
  %v35 = vld [vmem:[%s0 + $0x54] sm:$0xf]
  %v36 = vld [vmem:[%s0 + $0x58] sm:$0xf]
  %v37 = vld [vmem:[%s0 + $0x5c] sm:$0xf]
  %v38 = vld [vmem:[%s0 + $0x60] sm:$0xf]
  %v39 = vld [vmem:[%s0 + $0x64] sm:$0xf]
  %v40 = vld [vmem:[%s0 + $0x68] sm:$0xf]
  %v41 = vld [vmem:[%s0 + $0x6c] sm:$0xf]
  %v42 = vld [vmem:[%s0 + $0x70] sm:$0xf]
  %v43 = vld [vmem:[%s0 + $0x74] sm:$0xf]
  %v44 = vld [vmem:[%s0 + $0x78] sm:$0xf]
  %v45 = vld [vmem:[%s0 + $0x7c] sm:$0xf]
  %v46 = vld [vmem:[%s0 + $0x80] sm:$0xf]
  %v47 = vld [vmem:[%s0 + $0x84] sm:$0xf]
  %v48 = vld [vmem:[%s0 + $0x88] sm:$0xf]
  %v49 = vld [vmem:[%s0 + $0x8c] sm:$0xf]
  %v50 = vld [vmem:[%s0 + $0x90] sm:$0xf]
  %v51 = vld [vmem:[%s0 + $0x94] sm:$0xf]
  %v52 = vld [vmem:[%s0 + $0x98] sm:$0xf]
  %v53 = vld [vmem:[%s0 + $0x9c] sm:$0xf]
  %v54 = vld [vmem:[%s0 + $0xa0] sm:$0xf]
  %v55 = vld [vmem:[%s0 + $0xa4] sm:$0xf]
  %v56 = vld [vmem:[%s0 + $0xa8] sm:$0xf]
  %v57 = vld [vmem:[%s0 + $0xac] sm:$0xf]
  %v58 = vld [vmem:[%s0 + $0xb0] sm:$0xf]
  %v59 = vld [vmem:[%s0 + $0xb4] sm:$0xf]
  %v60 = vld [vmem:[%s0 + $0xb8] sm:$0xf]
  %v61 = vld [vmem:[%s0 + $0xbc] sm:$0xf]
  %v62 = vld [vmem:[%s0 + $0xc0] sm:$0xf]
  %v63 = vld [vmem:[%s0 + $0xc4] sm:$0xf]
  %v64 = vld [vmem:[%s0 + $0xc8] sm:$0xf]
  %v65 = vld [vmem:[%s0 + $0xcc] sm:$0xf]
  %v66 = vld [vmem:[%s0 + $0xd0] sm:$0xf]
  %v67 = vld [vmem:[%s0 + $0xd4] sm:$0xf]
  %v68 = vld [vmem:[%s0 + $0xd8] sm:$0xf]
  %v69 = vld [vmem:[%s0 + $0xdc] sm:$0xf]
  %v70 = vld [vmem:[%s0 + $0xe0] sm:$0xf]
  %v71 = vld [vmem:[%s0 + $0xe4] sm:$0xf]
  %v72 = vld [vmem:[%s0 + $0xe8] sm:$0xf]
  %v73 = vld [vmem:[%s0 + $0xec] sm:$0xf]
  %v74 = vld [vmem:[%s0 + $0xf0] sm:$0xf]
  %v75 = vld [vmem:[%s0 + $0xf4] sm:$0xf]
  %v76 = vld [vmem:[%s0 + $0xf8] sm:$0xf]
  %v77 = vld [vmem:[%s0 + $0xfc] sm:$0xf]
  %v78 = vunpack.c.l.bf16 %v14
  %v79 = vunpack.c.l.bf16 %v15
  %v80 = vunpack.c.l.bf16 %v16
  %v81 = vunpack.c.l.bf16 %v17
  %v82 = vunpack.c.l.bf16 %v18
  %v83 = vunpack.c.l.bf16 %v19
  %v84 = vunpack.c.l.bf16 %v20
  %v85 = vunpack.c.l.bf16 %v21
  %v86 = vunpack.c.l.bf16 %v22
  %v87 = vunpack.c.l.bf16 %v23
  %v88 = vunpack.c.l.bf16 %v24
  %v89 = vunpack.c.l.bf16 %v25
  %v90 = vunpack.c.l.bf16 %v26
  %v91 = vunpack.c.l.bf16 %v27
  %v92 = vunpack.c.l.bf16 %v28
  %v93 = vunpack.c.l.bf16 %v29
  %v94 = vunpack.c.l.bf16 %v30
  %v95 = vunpack.c.l.bf16 %v31
  %v96 = vunpack.c.l.bf16 %v32
  %v97 = vunpack.c.l.bf16 %v33
  %v98 = vunpack.c.l.bf16 %v34
  %v99 = vunpack.c.l.bf16 %v35
  %v100 = vunpack.c.l.bf16 %v36
  %v101 = vunpack.c.l.bf16 %v37
  %v102 = vunpack.c.l.bf16 %v38
  %v103 = vunpack.c.l.bf16 %v39
  %v104 = vunpack.c.l.bf16 %v40
  %v105 = vunpack.c.l.bf16 %v41
  %v106 = vunpack.c.l.bf16 %v42
  %v107 = vunpack.c.l.bf16 %v43
  %v108 = vunpack.c.l.bf16 %v44
  %v109 = vunpack.c.l.bf16 %v45
  %v110 = vunpack.c.l.bf16 %v46
  %v111 = vunpack.c.l.bf16 %v47
  %v112 = vunpack.c.l.bf16 %v48
  %v113 = vunpack.c.l.bf16 %v49
  %v114 = vunpack.c.l.bf16 %v50
  %v115 = vunpack.c.l.bf16 %v51
  %v116 = vunpack.c.l.bf16 %v52
  %v117 = vunpack.c.l.bf16 %v53
  %v118 = vunpack.c.l.bf16 %v54
  %v119 = vunpack.c.l.bf16 %v55
  %v120 = vunpack.c.l.bf16 %v56
  %v121 = vunpack.c.l.bf16 %v57
  %v122 = vunpack.c.l.bf16 %v58
  %v123 = vunpack.c.l.bf16 %v59
  %v124 = vunpack.c.l.bf16 %v60
  %v125 = vunpack.c.l.bf16 %v61
  %v126 = vunpack.c.l.bf16 %v62
  %v127 = vunpack.c.l.bf16 %v63
  %v128 = vunpack.c.l.bf16 %v64
  %v129 = vunpack.c.l.bf16 %v65
  %v130 = vunpack.c.l.bf16 %v66
  %v131 = vunpack.c.l.bf16 %v67
  %v132 = vunpack.c.l.bf16 %v68
  %v133 = vunpack.c.l.bf16 %v69
  %v134 = vunpack.c.l.bf16 %v70
  %v135 = vunpack.c.l.bf16 %v71
  %v136 = vunpack.c.l.bf16 %v72
  %v137 = vunpack.c.l.bf16 %v73
  %v138 = vunpack.c.l.bf16 %v74
  %v139 = vunpack.c.l.bf16 %v75
  %v140 = vunpack.c.l.bf16 %v76
  %v141 = vunpack.c.l.bf16 %v77
  %v142 = vld [vmem:[%s1] sm:$0x1]
  %v144 = vlaneseq
  %v145 = vshrl.u32 %v144, 7
  %v146 = vsub.s32 0, %v145
  %v147 = vrot.slane %v142, %v146
  %v149 = vmul.f32 %v78, %v147
  %v150 = vmul.f32 %v79, %v147
  %v151 = vmul.f32 %v80, %v147
  %v152 = vmul.f32 %v81, %v147
  %v153 = vmul.f32 %v82, %v147
  %v154 = vmul.f32 %v83, %v147
  %v155 = vmul.f32 %v84, %v147
  %v156 = vmul.f32 %v85, %v147
  %v157 = vmul.f32 %v86, %v147
  %v158 = vmul.f32 %v87, %v147
  %v159 = vmul.f32 %v88, %v147
  %v160 = vmul.f32 %v89, %v147
  %v161 = vmul.f32 %v90, %v147
  %v162 = vmul.f32 %v91, %v147
  %v163 = vmul.f32 %v92, %v147
  %v164 = vmul.f32 %v93, %v147
  %v165 = vmul.f32 %v94, %v147
  %v166 = vmul.f32 %v95, %v147
  %v167 = vmul.f32 %v96, %v147
  %v168 = vmul.f32 %v97, %v147
  %v169 = vmul.f32 %v98, %v147
  %v170 = vmul.f32 %v99, %v147
  %v171 = vmul.f32 %v100, %v147
  %v172 = vmul.f32 %v101, %v147
  %v173 = vmul.f32 %v102, %v147
  %v174 = vmul.f32 %v103, %v147
  %v175 = vmul.f32 %v104, %v147
  %v176 = vmul.f32 %v105, %v147
  %v177 = vmul.f32 %v106, %v147
  %v178 = vmul.f32 %v107, %v147
  %v179 = vmul.f32 %v108, %v147
  %v180 = vmul.f32 %v109, %v147
  %v181 = vmul.f32 %v110, %v147
  %v182 = vmul.f32 %v111, %v147
  %v183 = vmul.f32 %v112, %v147
  %v184 = vmul.f32 %v113, %v147
  %v185 = vmul.f32 %v114, %v147
  %v186 = vmul.f32 %v115, %v147
  %v187 = vmul.f32 %v116, %v147
  %v188 = vmul.f32 %v117, %v147
  %v189 = vmul.f32 %v118, %v147
  %v190 = vmul.f32 %v119, %v147
  %v191 = vmul.f32 %v120, %v147
  %v192 = vmul.f32 %v121, %v147
  %v193 = vmul.f32 %v122, %v147
  %v194 = vmul.f32 %v123, %v147
  %v195 = vmul.f32 %v124, %v147
  %v196 = vmul.f32 %v125, %v147
  %v197 = vmul.f32 %v126, %v147
  %v198 = vmul.f32 %v127, %v147
  %v199 = vmul.f32 %v128, %v147
  %v200 = vmul.f32 %v129, %v147
  %v201 = vmul.f32 %v130, %v147
  %v202 = vmul.f32 %v131, %v147
  %v203 = vmul.f32 %v132, %v147
  %v204 = vmul.f32 %v133, %v147
  %v205 = vmul.f32 %v134, %v147
  %v206 = vmul.f32 %v135, %v147
  %v207 = vmul.f32 %v136, %v147
  %v208 = vmul.f32 %v137, %v147
  %v209 = vmul.f32 %v138, %v147
  %v210 = vmul.f32 %v139, %v147
  %v211 = vmul.f32 %v140, %v147
  %v212 = vmul.f32 %v141, %v147
  %v213 = vld [vmem:[%s2] sm:$0x1]
  %v215 = vlaneseq
  %v216 = vshrl.u32 %v215, 7
  %v217 = vsub.s32 0, %v216
  %v218 = vrot.slane %v213, %v217
  %v220 = vadd.f32 %v149, %v218
  %v221 = vadd.f32 %v150, %v218
  %v222 = vadd.f32 %v151, %v218
  %v223 = vadd.f32 %v152, %v218
  %v224 = vadd.f32 %v153, %v218
  %v225 = vadd.f32 %v154, %v218
  %v226 = vadd.f32 %v155, %v218
  %v227 = vadd.f32 %v156, %v218
  %v228 = vadd.f32 %v157, %v218
  %v229 = vadd.f32 %v158, %v218
  %v230 = vadd.f32 %v159, %v218
  %v231 = vadd.f32 %v160, %v218
  %v232 = vadd.f32 %v161, %v218
  %v233 = vadd.f32 %v162, %v218
  %v234 = vadd.f32 %v163, %v218
  %v235 = vadd.f32 %v164, %v218
  %v236 = vadd.f32 %v165, %v218
  %v237 = vadd.f32 %v166, %v218
  %v238 = vadd.f32 %v167, %v218
  %v239 = vadd.f32 %v168, %v218
  %v240 = vadd.f32 %v169, %v218
  %v241 = vadd.f32 %v170, %v218
  %v242 = vadd.f32 %v171, %v218
  %v243 = vadd.f32 %v172, %v218
  %v244 = vadd.f32 %v173, %v218
  %v245 = vadd.f32 %v174, %v218
  %v246 = vadd.f32 %v175, %v218
  %v247 = vadd.f32 %v176, %v218
  %v248 = vadd.f32 %v177, %v218
  %v249 = vadd.f32 %v178, %v218
  %v250 = vadd.f32 %v179, %v218
  %v251 = vadd.f32 %v180, %v218
  %v252 = vadd.f32 %v181, %v218
  %v253 = vadd.f32 %v182, %v218
  %v254 = vadd.f32 %v183, %v218
  %v255 = vadd.f32 %v184, %v218
  %v256 = vadd.f32 %v185, %v218
  %v257 = vadd.f32 %v186, %v218
  %v258 = vadd.f32 %v187, %v218
  %v259 = vadd.f32 %v188, %v218
  %v260 = vadd.f32 %v189, %v218
  %v261 = vadd.f32 %v190, %v218
  %v262 = vadd.f32 %v191, %v218
  %v263 = vadd.f32 %v192, %v218
  %v264 = vadd.f32 %v193, %v218
  %v265 = vadd.f32 %v194, %v218
  %v266 = vadd.f32 %v195, %v218
  %v267 = vadd.f32 %v196, %v218
  %v268 = vadd.f32 %v197, %v218
  %v269 = vadd.f32 %v198, %v218
  %v270 = vadd.f32 %v199, %v218
  %v271 = vadd.f32 %v200, %v218
  %v272 = vadd.f32 %v201, %v218
  %v273 = vadd.f32 %v202, %v218
  %v274 = vadd.f32 %v203, %v218
  %v275 = vadd.f32 %v204, %v218
  %v276 = vadd.f32 %v205, %v218
  %v277 = vadd.f32 %v206, %v218
  %v278 = vadd.f32 %v207, %v218
  %v279 = vadd.f32 %v208, %v218
  %v280 = vadd.f32 %v209, %v218
  %v281 = vadd.f32 %v210, %v218
  %v282 = vadd.f32 %v211, %v218
  %v283 = vadd.f32 %v212, %v218
  %v284 = vmax.f32 %v220, 0.0
  %v285 = vmax.f32 %v221, 0.0
  %v286 = vmax.f32 %v222, 0.0
  %v287 = vmax.f32 %v223, 0.0
  %v288 = vmax.f32 %v224, 0.0
  %v289 = vmax.f32 %v225, 0.0
  %v290 = vmax.f32 %v226, 0.0
  %v291 = vmax.f32 %v227, 0.0
  %v292 = vmax.f32 %v228, 0.0
  %v293 = vmax.f32 %v229, 0.0
  %v294 = vmax.f32 %v230, 0.0
  %v295 = vmax.f32 %v231, 0.0
  %v296 = vmax.f32 %v232, 0.0
  %v297 = vmax.f32 %v233, 0.0
  %v298 = vmax.f32 %v234, 0.0
  %v299 = vmax.f32 %v235, 0.0
  %v300 = vmax.f32 %v236, 0.0
  %v301 = vmax.f32 %v237, 0.0
  %v302 = vmax.f32 %v238, 0.0
  %v303 = vmax.f32 %v239, 0.0
  %v304 = vmax.f32 %v240, 0.0
  %v305 = vmax.f32 %v241, 0.0
  %v306 = vmax.f32 %v242, 0.0
  %v307 = vmax.f32 %v243, 0.0
  %v308 = vmax.f32 %v244, 0.0
  %v309 = vmax.f32 %v245, 0.0
  %v310 = vmax.f32 %v246, 0.0
  %v311 = vmax.f32 %v247, 0.0
  %v312 = vmax.f32 %v248, 0.0
  %v313 = vmax.f32 %v249, 0.0
  %v314 = vmax.f32 %v250, 0.0
  %v315 = vmax.f32 %v251, 0.0
  %v316 = vmax.f32 %v252, 0.0
  %v317 = vmax.f32 %v253, 0.0
  %v318 = vmax.f32 %v254, 0.0
  %v319 = vmax.f32 %v255, 0.0
  %v320 = vmax.f32 %v256, 0.0
  %v321 = vmax.f32 %v257, 0.0
  %v322 = vmax.f32 %v258, 0.0
  %v323 = vmax.f32 %v259, 0.0
  %v324 = vmax.f32 %v260, 0.0
  %v325 = vmax.f32 %v261, 0.0
  %v326 = vmax.f32 %v262, 0.0
  %v327 = vmax.f32 %v263, 0.0
  %v328 = vmax.f32 %v264, 0.0
  %v329 = vmax.f32 %v265, 0.0
  %v330 = vmax.f32 %v266, 0.0
  %v331 = vmax.f32 %v267, 0.0
  %v332 = vmax.f32 %v268, 0.0
  %v333 = vmax.f32 %v269, 0.0
  %v334 = vmax.f32 %v270, 0.0
  %v335 = vmax.f32 %v271, 0.0
  %v336 = vmax.f32 %v272, 0.0
  %v337 = vmax.f32 %v273, 0.0
  %v338 = vmax.f32 %v274, 0.0
  %v339 = vmax.f32 %v275, 0.0
  %v340 = vmax.f32 %v276, 0.0
  %v341 = vmax.f32 %v277, 0.0
  %v342 = vmax.f32 %v278, 0.0
  %v343 = vmax.f32 %v279, 0.0
  %v344 = vmax.f32 %v280, 0.0
  %v345 = vmax.f32 %v281, 0.0
  %v346 = vmax.f32 %v282, 0.0
  %v347 = vmax.f32 %v283, 0.0
  %v348 = vpack.c.bf16 %v285, %v284
  %v349 = vpack.c.bf16 %v287, %v286
  %v350 = vpack.c.bf16 %v289, %v288
  %v351 = vpack.c.bf16 %v291, %v290
  %v352 = vpack.c.bf16 %v293, %v292
  %v353 = vpack.c.bf16 %v295, %v294
  %v354 = vpack.c.bf16 %v297, %v296
  %v355 = vpack.c.bf16 %v299, %v298
  %v356 = vpack.c.bf16 %v301, %v300
  %v357 = vpack.c.bf16 %v303, %v302
  %v358 = vpack.c.bf16 %v305, %v304
  %v359 = vpack.c.bf16 %v307, %v306
  %v360 = vpack.c.bf16 %v309, %v308
  %v361 = vpack.c.bf16 %v311, %v310
  %v362 = vpack.c.bf16 %v313, %v312
  %v363 = vpack.c.bf16 %v315, %v314
  %v364 = vpack.c.bf16 %v317, %v316
  %v365 = vpack.c.bf16 %v319, %v318
  %v366 = vpack.c.bf16 %v321, %v320
  %v367 = vpack.c.bf16 %v323, %v322
  %v368 = vpack.c.bf16 %v325, %v324
  %v369 = vpack.c.bf16 %v327, %v326
  %v370 = vpack.c.bf16 %v329, %v328
  %v371 = vpack.c.bf16 %v331, %v330
  %v372 = vpack.c.bf16 %v333, %v332
  %v373 = vpack.c.bf16 %v335, %v334
  %v374 = vpack.c.bf16 %v337, %v336
  %v375 = vpack.c.bf16 %v339, %v338
  %v376 = vpack.c.bf16 %v341, %v340
  %v377 = vpack.c.bf16 %v343, %v342
  %v378 = vpack.c.bf16 %v345, %v344
  %v379 = vpack.c.bf16 %v347, %v346
  %v412 = vunpack.c.l.b16 %v348
  %v413 = vunpack.c.h.b16 %v348
  %v414 = vunpack.c.l.b16 %v349
  %v415 = vunpack.c.h.b16 %v349
  %v416 = vunpack.c.l.b16 %v350
  %v417 = vunpack.c.h.b16 %v350
  %v418 = vunpack.c.l.b16 %v351
  %v419 = vunpack.c.h.b16 %v351
  %v420 = vunpack.c.l.b16 %v352
  %v421 = vunpack.c.h.b16 %v352
  %v422 = vunpack.c.l.b16 %v353
  %v423 = vunpack.c.h.b16 %v353
  %v424 = vunpack.c.l.b16 %v354
  %v425 = vunpack.c.h.b16 %v354
  %v426 = vunpack.c.l.b16 %v355
  %v427 = vunpack.c.h.b16 %v355
  %v428 = vunpack.c.l.b16 %v356
  %v429 = vunpack.c.h.b16 %v356
  %v430 = vunpack.c.l.b16 %v357
  %v431 = vunpack.c.h.b16 %v357
  %v432 = vunpack.c.l.b16 %v358
  %v433 = vunpack.c.h.b16 %v358
  %v434 = vunpack.c.l.b16 %v359
  %v435 = vunpack.c.h.b16 %v359
  %v436 = vunpack.c.l.b16 %v360
  %v437 = vunpack.c.h.b16 %v360
  %v438 = vunpack.c.l.b16 %v361
  %v439 = vunpack.c.h.b16 %v361
  %v440 = vunpack.c.l.b16 %v362
  %v441 = vunpack.c.h.b16 %v362
  %v442 = vunpack.c.l.b16 %v363
  %v443 = vunpack.c.h.b16 %v363
  %v444 = vunpack.c.l.b16 %v364
  %v445 = vunpack.c.h.b16 %v364
  %v446 = vunpack.c.l.b16 %v365
  %v447 = vunpack.c.h.b16 %v365
  %v448 = vunpack.c.l.b16 %v366
  %v449 = vunpack.c.h.b16 %v366
  %v450 = vunpack.c.l.b16 %v367
  %v451 = vunpack.c.h.b16 %v367
  %v452 = vunpack.c.l.b16 %v368
  %v453 = vunpack.c.h.b16 %v368
  %v454 = vunpack.c.l.b16 %v369
  %v455 = vunpack.c.h.b16 %v369
  %v456 = vunpack.c.l.b16 %v370
  %v457 = vunpack.c.h.b16 %v370
  %v458 = vunpack.c.l.b16 %v371
  %v459 = vunpack.c.h.b16 %v371
  %v460 = vunpack.c.l.b16 %v372
  %v461 = vunpack.c.h.b16 %v372
  %v462 = vunpack.c.l.b16 %v373
  %v463 = vunpack.c.h.b16 %v373
  %v464 = vunpack.c.l.b16 %v374
  %v465 = vunpack.c.h.b16 %v374
  %v466 = vunpack.c.l.b16 %v375
  %v467 = vunpack.c.h.b16 %v375
  %v468 = vunpack.c.l.b16 %v376
  %v469 = vunpack.c.h.b16 %v376
  %v470 = vunpack.c.l.b16 %v377
  %v471 = vunpack.c.h.b16 %v377
  %v472 = vunpack.c.l.b16 %v378
  %v473 = vunpack.c.h.b16 %v378
  %v474 = vunpack.c.l.b16 %v379
  %v475 = vunpack.c.h.b16 %v379
  %v476 = vpack.c.b16 %v412, %v412
  %v477 = vpack.c.b16 %v413, %v413
  %v478 = vpack.c.b16 %v414, %v414
  %v479 = vpack.c.b16 %v415, %v415
  %v480 = vpack.c.b16 %v416, %v416
  %v481 = vpack.c.b16 %v417, %v417
  %v482 = vpack.c.b16 %v418, %v418
  %v483 = vpack.c.b16 %v419, %v419
  %v484 = vpack.c.b16 %v420, %v420
  %v485 = vpack.c.b16 %v421, %v421
  %v486 = vpack.c.b16 %v422, %v422
  %v487 = vpack.c.b16 %v423, %v423
  %v488 = vpack.c.b16 %v424, %v424
  %v489 = vpack.c.b16 %v425, %v425
  %v490 = vpack.c.b16 %v426, %v426
  %v491 = vpack.c.b16 %v427, %v427
  %v492 = vpack.c.b16 %v428, %v428
  %v493 = vpack.c.b16 %v429, %v429
  %v494 = vpack.c.b16 %v430, %v430
  %v495 = vpack.c.b16 %v431, %v431
  %v496 = vpack.c.b16 %v432, %v432
  %v497 = vpack.c.b16 %v433, %v433
  %v498 = vpack.c.b16 %v434, %v434
  %v499 = vpack.c.b16 %v435, %v435
  %v500 = vpack.c.b16 %v436, %v436
  %v501 = vpack.c.b16 %v437, %v437
  %v502 = vpack.c.b16 %v438, %v438
  %v503 = vpack.c.b16 %v439, %v439
  %v504 = vpack.c.b16 %v440, %v440
  %v505 = vpack.c.b16 %v441, %v441
  %v506 = vpack.c.b16 %v442, %v442
  %v507 = vpack.c.b16 %v443, %v443
  %v508 = vpack.c.b16 %v444, %v444
  %v509 = vpack.c.b16 %v445, %v445
  %v510 = vpack.c.b16 %v446, %v446
  %v511 = vpack.c.b16 %v447, %v447
  %v512 = vpack.c.b16 %v448, %v448
  %v513 = vpack.c.b16 %v449, %v449
  %v514 = vpack.c.b16 %v450, %v450
  %v515 = vpack.c.b16 %v451, %v451
  %v516 = vpack.c.b16 %v452, %v452
  %v517 = vpack.c.b16 %v453, %v453
  %v518 = vpack.c.b16 %v454, %v454
  %v519 = vpack.c.b16 %v455, %v455
  %v520 = vpack.c.b16 %v456, %v456
  %v521 = vpack.c.b16 %v457, %v457
  %v522 = vpack.c.b16 %v458, %v458
  %v523 = vpack.c.b16 %v459, %v459
  %v524 = vpack.c.b16 %v460, %v460
  %v525 = vpack.c.b16 %v461, %v461
  %v526 = vpack.c.b16 %v462, %v462
  %v527 = vpack.c.b16 %v463, %v463
  %v528 = vpack.c.b16 %v464, %v464
  %v529 = vpack.c.b16 %v465, %v465
  %v530 = vpack.c.b16 %v466, %v466
  %v531 = vpack.c.b16 %v467, %v467
  %v532 = vpack.c.b16 %v468, %v468
  %v533 = vpack.c.b16 %v469, %v469
  %v534 = vpack.c.b16 %v470, %v470
  %v535 = vpack.c.b16 %v471, %v471
  %v536 = vpack.c.b16 %v472, %v472
  %v537 = vpack.c.b16 %v473, %v473
  %v538 = vpack.c.b16 %v474, %v474
  %v539 = vpack.c.b16 %v475, %v475
  %604 = vst [vmem:[%s3] sm:$0xf] %v476
  %605 = vst [vmem:[%s3 + $0x4] sm:$0xf] %v477
  %606 = vst [vmem:[%s3 + $0x8] sm:$0xf] %v478
  %607 = vst [vmem:[%s3 + $0xc] sm:$0xf] %v479
  %608 = vst [vmem:[%s3 + $0x10] sm:$0xf] %v480
  %609 = vst [vmem:[%s3 + $0x14] sm:$0xf] %v481
  %610 = vst [vmem:[%s3 + $0x18] sm:$0xf] %v482
  %611 = vst [vmem:[%s3 + $0x1c] sm:$0xf] %v483
  %612 = vst [vmem:[%s3 + $0x20] sm:$0xf] %v484
  %613 = vst [vmem:[%s3 + $0x24] sm:$0xf] %v485
  %614 = vst [vmem:[%s3 + $0x28] sm:$0xf] %v486
  %615 = vst [vmem:[%s3 + $0x2c] sm:$0xf] %v487
  %616 = vst [vmem:[%s3 + $0x30] sm:$0xf] %v488
  %617 = vst [vmem:[%s3 + $0x34] sm:$0xf] %v489
  %618 = vst [vmem:[%s3 + $0x38] sm:$0xf] %v490
  %619 = vst [vmem:[%s3 + $0x3c] sm:$0xf] %v491
  %620 = vst [vmem:[%s3 + $0x40] sm:$0xf] %v492
  %621 = vst [vmem:[%s3 + $0x44] sm:$0xf] %v493
  %622 = vst [vmem:[%s3 + $0x48] sm:$0xf] %v494
  %623 = vst [vmem:[%s3 + $0x4c] sm:$0xf] %v495
  %624 = vst [vmem:[%s3 + $0x50] sm:$0xf] %v496
  %625 = vst [vmem:[%s3 + $0x54] sm:$0xf] %v497
  %626 = vst [vmem:[%s3 + $0x58] sm:$0xf] %v498
  %627 = vst [vmem:[%s3 + $0x5c] sm:$0xf] %v499
  %628 = vst [vmem:[%s3 + $0x60] sm:$0xf] %v500
  %629 = vst [vmem:[%s3 + $0x64] sm:$0xf] %v501
  %630 = vst [vmem:[%s3 + $0x68] sm:$0xf] %v502
  %631 = vst [vmem:[%s3 + $0x6c] sm:$0xf] %v503
  %632 = vst [vmem:[%s3 + $0x70] sm:$0xf] %v504
  %633 = vst [vmem:[%s3 + $0x74] sm:$0xf] %v505
  %634 = vst [vmem:[%s3 + $0x78] sm:$0xf] %v506
  %635 = vst [vmem:[%s3 + $0x7c] sm:$0xf] %v507
  %636 = vst [vmem:[%s3 + $0x80] sm:$0xf] %v508
  %637 = vst [vmem:[%s3 + $0x84] sm:$0xf] %v509
  %638 = vst [vmem:[%s3 + $0x88] sm:$0xf] %v510
  %639 = vst [vmem:[%s3 + $0x8c] sm:$0xf] %v511
  %640 = vst [vmem:[%s3 + $0x90] sm:$0xf] %v512
  %641 = vst [vmem:[%s3 + $0x94] sm:$0xf] %v513
  %642 = vst [vmem:[%s3 + $0x98] sm:$0xf] %v514
  %643 = vst [vmem:[%s3 + $0x9c] sm:$0xf] %v515
  %644 = vst [vmem:[%s3 + $0xa0] sm:$0xf] %v516
  %645 = vst [vmem:[%s3 + $0xa4] sm:$0xf] %v517
  %646 = vst [vmem:[%s3 + $0xa8] sm:$0xf] %v518
  %647 = vst [vmem:[%s3 + $0xac] sm:$0xf] %v519
  %648 = vst [vmem:[%s3 + $0xb0] sm:$0xf] %v520
  %649 = vst [vmem:[%s3 + $0xb4] sm:$0xf] %v521
  %650 = vst [vmem:[%s3 + $0xb8] sm:$0xf] %v522
  %651 = vst [vmem:[%s3 + $0xbc] sm:$0xf] %v523
  %652 = vst [vmem:[%s3 + $0xc0] sm:$0xf] %v524
  %653 = vst [vmem:[%s3 + $0xc4] sm:$0xf] %v525
  %654 = vst [vmem:[%s3 + $0xc8] sm:$0xf] %v526
  %655 = vst [vmem:[%s3 + $0xcc] sm:$0xf] %v527
  %656 = vst [vmem:[%s3 + $0xd0] sm:$0xf] %v528
  %657 = vst [vmem:[%s3 + $0xd4] sm:$0xf] %v529
  %658 = vst [vmem:[%s3 + $0xd8] sm:$0xf] %v530
  %659 = vst [vmem:[%s3 + $0xdc] sm:$0xf] %v531
  %660 = vst [vmem:[%s3 + $0xe0] sm:$0xf] %v532
  %661 = vst [vmem:[%s3 + $0xe4] sm:$0xf] %v533
  %662 = vst [vmem:[%s3 + $0xe8] sm:$0xf] %v534
  %663 = vst [vmem:[%s3 + $0xec] sm:$0xf] %v535
  %664 = vst [vmem:[%s3 + $0xf0] sm:$0xf] %v536
  %665 = vst [vmem:[%s3 + $0xf4] sm:$0xf] %v537
  %666 = vst [vmem:[%s3 + $0xf8] sm:$0xf] %v538
  %667 = vst [vmem:[%s3 + $0xfc] sm:$0xf] %v539
  // Predicated region
  $region14: #{apf_forward.15} parent=0 // pred_check
    _
  $region15: #{apf_forward.15} parent=0 // pred_check_branch
    %669 = sbr.rel (0) target = $region17
  $region16: #{apf_forward.15} parent=0 // pred_region
    _
  $region17: #{apf_forward.15} parent=0 // pred_fallthru
    _
  // Predicated region
  $region18: #{apf_forward.15} parent=0 // pred_check
    _
  $region19: #{apf_forward.15} parent=0 // pred_check_branch
    %671 = sbr.rel (0) target = $region21
  $region20: #{apf_forward.15} parent=0 // pred_region
    _
  $region21: #{apf_forward.15} parent=0 // pred_fallthru
    _

</llo_original>
